<compile_context>
chip_gen: v7x
topology: tpu7x:2x2x1
jax: 0.10.0
libtpu: 0.0.40
codegen_flags: <defaults>
</compile_context>

<pallas_src>
import jax
import jax.numpy as jnp
from jax import lax
from jax.experimental import pallas as pl
from jax.experimental.pallas import tpu as pltpu


# ----------------------------------------------------------------------------
# Tiling / VMEM helpers
# ----------------------------------------------------------------------------
def _vmem_capacity_bytes(default=64 * 1024 * 1024) -> int:
    """Physical VMEM per TensorCore; conservative (v7x) default if query fails."""
    try:
        info = pltpu.get_tpu_info()
        cap = getattr(info, "vmem_capacity_bytes", None)
        if cap:
            return int(cap)
    except Exception:
        pass
    return default


def _pick_hw_tile(hw: int, c: int, itemsize: int, *, cap: int = 4096,
                  per_buffer_bytes: int = 16 * 1024 * 1024) -> int:
    """Pick the streamed HW tile width (always a multiple of 128).

    Prefers the largest multiple-of-128 divisor of `hw` that fits the per-buffer
    budget and the lane cap.  If no such divisor exists, returns a budget-sized
    multiple of 128 and the wrapper zero-pads HW up to a multiple of it."""
    max_lanes = max(128, (per_buffer_bytes // max(1, c * itemsize)) // 128 * 128)
    limit = max(128, min(cap, max_lanes))
    best = None
    t = 128
    while t <= min(hw, limit):
        if hw % t == 0:
            best = t
        t += 128
    if best is not None:
        return best
    padded = -(-hw // 128) * 128
    return min(limit, padded)


# ----------------------------------------------------------------------------
# Phase 1: streaming spatial-mean kernel (HBM-bound part)
# ----------------------------------------------------------------------------
def make_pooled_mean_kernel(*, hw: int, t_hw: int, lane: int = 128):
    n_chunks = t_hw // lane
    inv_hw = 1.0 / float(hw)          # divide by the TRUE HW (padding adds zeros)

    def pooled_mean_kernel(x_ref, out_ref, acc_ref):
        k = pl.program_id(1)

        @pl.when(k == 0)
        def _():
            acc_ref[...] = jnp.zeros_like(acc_ref)

        # Per-chunk ref loads: only one (1, C, 128) chunk + the accumulator are
        # live at a time, so the vld slot hides fully under the tile DMA.
        def body(j, carry):
            off = pl.multiple_of(j * lane, lane)
            acc_ref[...] += x_ref[:, :, pl.ds(off, lane)].astype(jnp.float32)
            return carry

        lax.fori_loop(0, n_chunks, body, jnp.int32(0), unroll=True)

        @pl.when(k == pl.num_programs(1) - 1)
        def _():
            pooled = jnp.sum(acc_ref[...], axis=-1) * inv_hw      # (1, C)
            out_ref[...] = pooled.reshape(out_ref.shape).astype(out_ref.dtype)

    return pooled_mean_kernel


# ----------------------------------------------------------------------------
# Phase 2: tiny fused MLP/softmax/bin-centers epilogue (runs once per forward)
# ----------------------------------------------------------------------------
def make_epilogue_kernel(max_depth: float, min_depth: float):
    scale = float(max_depth) - float(min_depth)

    def epilogue_kernel(pooled_ref, w1_ref, b1_ref, w2_ref, b2_ref, tri_ref,
                        out_ref):
        pooled = pooled_ref[...]                                   # (N, C)

        h = jnp.dot(pooled, w1_ref[...],
                    preferred_element_type=jnp.float32,
                    precision=jax.lax.Precision.HIGHEST) + b1_ref[...]
        h = jax.nn.gelu(h, approximate=False)                      # torch GELU (erf)

        logits = jnp.dot(h, w2_ref[...],
                         preferred_element_type=jnp.float32,
                         precision=jax.lax.Precision.HIGHEST) + b2_ref[...]

        # softmax over bins; the reference's post-softmax renorm is a no-op.
        m = jnp.max(logits, axis=1, keepdims=True)
        e = jnp.exp(logits - m)
        s = jnp.sum(e, axis=1, keepdims=True)
        bins = e * pl.reciprocal(s, approx=False)
        widths = scale * bins                                      # (N, Dout)

        # centers = min_depth + inclusive_cumsum(widths) - 0.5 * widths
        # inclusive cumsum as a matmul against the hoisted upper-tri constant.
        csum = jnp.dot(widths, tri_ref[...],
                       preferred_element_type=jnp.float32,
                       precision=jax.lax.Precision.HIGHEST)
        centers = min_depth + csum - 0.5 * widths
        out_ref[...] = centers.astype(out_ref.dtype)

    return epilogue_kernel


# ----------------------------------------------------------------------------
# Wrapper
# ----------------------------------------------------------------------------
def bcp_forward(x, w1, b1, w2, b2, *, max_depth, min_depth):
    """x: (N, C, H, W); w1: (C, Hd); w2: (Hd, Dout). Returns (N, Dout, 1, 1) f32.

    x may be f32 or bf16 (bf16 halves the streamed bytes; accumulation is f32)."""
    N, C, H, W = x.shape
    HW = H * W
    Hd = w1.shape[1]
    Dout = w2.shape[1]
    itemsize = jnp.dtype(x.dtype).itemsize

    # --- generation-aware budgets -------------------------------------------
    vmem_cap = _vmem_capacity_bytes()
    per_buffer = min(16 * 1024 * 1024, (vmem_cap * 7 // 10) // 2)
    t_hw = _pick_hw_tile(HW, C, itemsize, cap=4096, per_buffer_bytes=per_buffer)

    # --- flatten + (optionally) zero-pad HW to a multiple of the tile -------
    hw_pad = -(-HW // t_hw) * t_hw
    x_flat = x.reshape(N, C, HW)
    if hw_pad != HW:
        x_flat = jnp.pad(x_flat, ((0, 0), (0, 0), (0, hw_pad - HW)))
    num_k = hw_pad // t_hw

    # --- phase 1: streaming spatial mean ------------------------------------
    x_block_bytes = C * t_hw * itemsize
    acc_bytes = C * 128 * 4
    stream_vmem = int(min(vmem_cap * 85 // 100,
                          max(16 << 20, 2 * x_block_bytes + acc_bytes + (2 << 20))))

    stream_cost = pl.CostEstimate(
        flops=int(N * C * hw_pad),
        transcendentals=0,
        bytes_accessed=int(N * C * hw_pad * itemsize + N * C * 4),
    )

    # TODO(synk): on v7x with N == 1, add a size-2 "parallel" split of the HW
    # axis (per-core partial sums combined afterwards) so both TensorCores
    # contribute DMA bandwidth.
    pooled = pl.pallas_call(
        make_pooled_mean_kernel(hw=HW, t_hw=t_hw, lane=128),
        out_shape=jax.ShapeDtypeStruct((N, 1, C), jnp.float32),
        grid_spec=pltpu.PrefetchScalarGridSpec(
            num_scalar_prefetch=0,
            grid=(N, num_k),
            in_specs=[pl.BlockSpec((1, C, t_hw), lambda n, k: (n, 0, k))],
            out_specs=pl.BlockSpec((1, 1, C), lambda n, k: (n, 0, 0)),
            scratch_shapes=[pltpu.VMEM((1, C, 128), jnp.float32)],
        ),
        compiler_params=pltpu.CompilerParams(
            dimension_semantics=("parallel", "arbitrary"),
            vmem_limit_bytes=stream_vmem,
        ),
        cost_estimate=stream_cost,
    )(x_flat)
    pooled = pooled.reshape(N, C)

    # --- phase 2: fused MLP / softmax / bin-centers epilogue ----------------
    tri = (jnp.arange(Dout)[:, None] <= jnp.arange(Dout)[None, :]).astype(jnp.float32)
    b1r = b1.reshape(1, Hd).astype(jnp.float32)
    b2r = b2.reshape(1, Dout).astype(jnp.float32)

    epi_in_bytes = 4 * (N * C + C * Hd + Hd + Hd * Dout + Dout
                        + Dout * Dout + N * Dout)
    epi_vmem = int(min(vmem_cap * 85 // 100,
                       max(8 << 20, 2 * epi_in_bytes + (4 << 20))))

    centers = pl.pallas_call(
        make_epilogue_kernel(float(max_depth), float(min_depth)),
        out_shape=jax.ShapeDtypeStruct((N, Dout), jnp.float32),
        grid=(1,),
        in_specs=[
            pl.BlockSpec((N, C), lambda i: (0, 0)),        # pooled means
            pl.BlockSpec((C, Hd), lambda i: (0, 0)),       # w1
            pl.BlockSpec((1, Hd), lambda i: (0, 0)),       # b1
            pl.BlockSpec((Hd, Dout), lambda i: (0, 0)),    # w2
            pl.BlockSpec((1, Dout), lambda i: (0, 0)),     # b2
            pl.BlockSpec((Dout, Dout), lambda i: (0, 0)),  # hoisted upper-tri
        ],
        out_specs=pl.BlockSpec((N, Dout), lambda i: (0, 0)),
        compiler_params=pltpu.CompilerParams(
            dimension_semantics=("arbitrary",),
            vmem_limit_bytes=epi_vmem,
        ),
    )(pooled, w1.astype(jnp.float32), b1r, w2.astype(jnp.float32), b2r, tri)

    return centers.reshape(N, Dout, 1, 1)


# ----------------------------------------------------------------------------
# Pure-JAX reference (mirrors the PyTorch forward exactly)
# ----------------------------------------------------------------------------
def bcp_reference(x, w1, b1, w2, b2, *, max_depth, min_depth):
    N, C, H, W = x.shape
    pooled = jnp.mean(x.astype(jnp.float32).reshape(N, C, H * W), axis=2)
    h = jax.nn.gelu(pooled @ w1 + b1, approximate=False)
    logits = h @ w2 + b2
    bins = jax.nn.softmax(logits, axis=1)
    bins = bins / jnp.sum(bins, axis=1, keepdims=True)
    widths = (max_depth - min_depth) * bins
    widths = jnp.pad(widths, ((0, 0), (1, 0)), constant_values=min_depth)
    edges = jnp.cumsum(widths, axis=1)
    centers = 0.5 * (edges[:, :-1] + edges[:, 1:])
    return centers.reshape(N, centers.shape[1], 1, 1)


if __name__ == "__main__":
    max_depth, min_depth = 10.0, 0.001

    # Main config (scaled down from in=512, hidden=2048, out=256):
    # HW = 16384 -> 4 streamed 4096-lane tiles per batch element.
    N, C, H, W = 2, 32, 128, 128
    hidden, Dout = 128, 64

    key = jax.random.PRNGKey(0)
    kx, k1, k2, k3, k4 = jax.random.split(key, 5)
    x = jax.random.normal(kx, (N, C, H, W), dtype=jnp.float32)
    # nn.Linear stores weight as (out, in); we pass the transposed (in, out).
    w1 = jax.random.normal(k1, (C, hidden), dtype=jnp.float32) / jnp.sqrt(C)
    b1 = jax.random.normal(k2, (hidden,), dtype=jnp.float32) * 0.01
    w2 = jax.random.normal(k3, (hidden, Dout), dtype=jnp.float32) / jnp.sqrt(hidden)
    b2 = jax.random.normal(k4, (Dout,), dtype=jnp.float32) * 0.01

    out = jax.block_until_ready(
        bcp_forward(x, w1, b1, w2, b2, max_depth=max_depth, min_depth=min_depth))
    ref = bcp_reference(x, w1, b1, w2, b2, max_depth=max_depth, min_depth=min_depth)
    assert out.shape == (N, Dout, 1, 1)
    assert jnp.allclose(out, ref, atol=1e-4, rtol=1e-4), \
        float(jnp.max(jnp.abs(out - ref)))

    # Secondary config: non-128-divisible HW (30x30) exercises the zero-pad path.
    N2, C2, H2, W2 = 1, 16, 30, 30
    h2, d2 = 32, 32
    kx2, k5, k6, k7, k8 = jax.random.split(jax.random.PRNGKey(0), 5)
    x2 = jax.random.normal(kx2, (N2, C2, H2, W2), dtype=jnp.float32)
    w1b = jax.random.normal(k5, (C2, h2), dtype=jnp.float32) / jnp.sqrt(C2)
    b1b = jax.random.normal(k6, (h2,), dtype=jnp.float32) * 0.01
    w2b = jax.random.normal(k7, (h2, d2), dtype=jnp.float32) / jnp.sqrt(h2)
    b2b = jax.random.normal(k8, (d2,), dtype=jnp.float32) * 0.01

    out2 = jax.block_until_ready(
        bcp_forward(x2, w1b, b1b, w2b, b2b, max_depth=max_depth, min_depth=min_depth))
    ref2 = bcp_reference(x2, w1b, b1b, w2b, b2b, max_depth=max_depth, min_depth=min_depth)
    assert jnp.allclose(out2, ref2, atol=1e-4, rtol=1e-4), \
        float(jnp.max(jnp.abs(out2 - ref2)))

    print("KERNEL_OK")
</pallas_src>

<mosaic_0001>
module attributes {stable_mosaic.version = 11 : i64} {
  func.func @pooled_mean_kernel(%arg0: i32, %arg1: i32, %arg2: memref<1x32x4096xf32, #tpu.memory_space<vmem>>, %arg3: memref<1x1x32xf32, #tpu.memory_space<vmem>>, %arg4: memref<1x32x128xf32, #tpu.memory_space<vmem>>) attributes {dimension_semantics = [#tpu.dimension_semantics<parallel>, #tpu.dimension_semantics<arbitrary>], iteration_bounds = array<i64: 2, 4>, scalar_prefetch = 0 : i64, scratch_operands = 1 : i64, tpu.core_type = #tpu.core_type<tc>, window_params = [{transform_indices = @transform_0, window_bounds = array<i64: 1, 32, 4096>}, {transform_indices = @transform_1, window_bounds = array<i64: 1, 1, 32>}]} {
    %c0_i32 = arith.constant 0 : i32
    %0 = arith.cmpi eq, %arg1, %c0_i32 : i32
    %1 = arith.extui %0 : i1 to i32
    %c0_i32_0 = arith.constant 0 : i32
    %2 = arith.cmpi ne, %1, %c0_i32_0 : i32
    scf.if %2 {
      %cst = arith.constant 0.000000e+00 : f32
      %230 = vector.broadcast %cst : f32 to vector<1x32x128xf32>
      %c0_290 = arith.constant 0 : index
      %c0_291 = arith.constant 0 : index
      %c0_292 = arith.constant 0 : index
      %231 = vector.load %arg4[%c0_290, %c0_291, %c0_292] : memref<1x32x128xf32, #tpu.memory_space<vmem>>, vector<1x32x128xf32>
      tpu.vector_store %arg4[%c0_290, %c0_291, %c0_292], %230 {strides = array<i32>} : memref<1x32x128xf32, #tpu.memory_space<vmem>>, vector<1x32x128xf32>,
    } else {
    }
    %c0_i32_1 = arith.constant 0 : i32
    %c128_i32 = arith.constant 128 : i32
    %3 = arith.muli %c0_i32_1, %c128_i32 : i32
    %4 = tpu.assume_multiple %3, 128 : i32
    %c0 = arith.constant 0 : index
    %c0_2 = arith.constant 0 : index
    %c0_3 = arith.constant 0 : index
    %5 = vector.load %arg4[%c0, %c0_2, %c0_3] : memref<1x32x128xf32, #tpu.memory_space<vmem>>, vector<1x32x128xf32>
    %c0_4 = arith.constant 0 : index
    %c0_5 = arith.constant 0 : index
    %6 = arith.index_cast %4 : i32 to index
    %7 = vector.load %arg2[%c0_4, %c0_5, %6] : memref<1x32x4096xf32, #tpu.memory_space<vmem>>, vector<1x32x128xf32>
    %8 = arith.addf %5, %7 : vector<1x32x128xf32>
    %c0_6 = arith.constant 0 : index
    %c0_7 = arith.constant 0 : index
    %c0_8 = arith.constant 0 : index
    %9 = vector.load %arg4[%c0_6, %c0_7, %c0_8] : memref<1x32x128xf32, #tpu.memory_space<vmem>>, vector<1x32x128xf32>
    tpu.vector_store %arg4[%c0_6, %c0_7, %c0_8], %8 {strides = array<i32>} : memref<1x32x128xf32, #tpu.memory_space<vmem>>, vector<1x32x128xf32>,
    %c1_i32 = arith.constant 1 : i32
    %c128_i32_9 = arith.constant 128 : i32
    %10 = arith.muli %c1_i32, %c128_i32_9 : i32
    %11 = tpu.assume_multiple %10, 128 : i32
    %c0_10 = arith.constant 0 : index
    %c0_11 = arith.constant 0 : index
    %c0_12 = arith.constant 0 : index
    %12 = vector.load %arg4[%c0_10, %c0_11, %c0_12] : memref<1x32x128xf32, #tpu.memory_space<vmem>>, vector<1x32x128xf32>
    %c0_13 = arith.constant 0 : index
    %c0_14 = arith.constant 0 : index
    %13 = arith.index_cast %11 : i32 to index
    %14 = vector.load %arg2[%c0_13, %c0_14, %13] : memref<1x32x4096xf32, #tpu.memory_space<vmem>>, vector<1x32x128xf32>
    %15 = arith.addf %12, %14 : vector<1x32x128xf32>
    %c0_15 = arith.constant 0 : index
    %c0_16 = arith.constant 0 : index
    %c0_17 = arith.constant 0 : index
    %16 = vector.load %arg4[%c0_15, %c0_16, %c0_17] : memref<1x32x128xf32, #tpu.memory_space<vmem>>, vector<1x32x128xf32>
    tpu.vector_store %arg4[%c0_15, %c0_16, %c0_17], %15 {strides = array<i32>} : memref<1x32x128xf32, #tpu.memory_space<vmem>>, vector<1x32x128xf32>,
    %c2_i32 = arith.constant 2 : i32
    %c128_i32_18 = arith.constant 128 : i32
    %17 = arith.muli %c2_i32, %c128_i32_18 : i32
    %18 = tpu.assume_multiple %17, 128 : i32
    %c0_19 = arith.constant 0 : index
    %c0_20 = arith.constant 0 : index
    %c0_21 = arith.constant 0 : index
    %19 = vector.load %arg4[%c0_19, %c0_20, %c0_21] : memref<1x32x128xf32, #tpu.memory_space<vmem>>, vector<1x32x128xf32>
    %c0_22 = arith.constant 0 : index
    %c0_23 = arith.constant 0 : index
    %20 = arith.index_cast %18 : i32 to index
    %21 = vector.load %arg2[%c0_22, %c0_23, %20] : memref<1x32x4096xf32, #tpu.memory_space<vmem>>, vector<1x32x128xf32>
    %22 = arith.addf %19, %21 : vector<1x32x128xf32>
    %c0_24 = arith.constant 0 : index
    %c0_25 = arith.constant 0 : index
    %c0_26 = arith.constant 0 : index
    %23 = vector.load %arg4[%c0_24, %c0_25, %c0_26] : memref<1x32x128xf32, #tpu.memory_space<vmem>>, vector<1x32x128xf32>
    tpu.vector_store %arg4[%c0_24, %c0_25, %c0_26], %22 {strides = array<i32>} : memref<1x32x128xf32, #tpu.memory_space<vmem>>, vector<1x32x128xf32>,
    %c3_i32 = arith.constant 3 : i32
    %c128_i32_27 = arith.constant 128 : i32
    %24 = arith.muli %c3_i32, %c128_i32_27 : i32
    %25 = tpu.assume_multiple %24, 128 : i32
    %c0_28 = arith.constant 0 : index
    %c0_29 = arith.constant 0 : index
    %c0_30 = arith.constant 0 : index
    %26 = vector.load %arg4[%c0_28, %c0_29, %c0_30] : memref<1x32x128xf32, #tpu.memory_space<vmem>>, vector<1x32x128xf32>
    %c0_31 = arith.constant 0 : index
    %c0_32 = arith.constant 0 : index
    %27 = arith.index_cast %25 : i32 to index
    %28 = vector.load %arg2[%c0_31, %c0_32, %27] : memref<1x32x4096xf32, #tpu.memory_space<vmem>>, vector<1x32x128xf32>
    %29 = arith.addf %26, %28 : vector<1x32x128xf32>
    %c0_33 = arith.constant 0 : index
    %c0_34 = arith.constant 0 : index
    %c0_35 = arith.constant 0 : index
    %30 = vector.load %arg4[%c0_33, %c0_34, %c0_35] : memref<1x32x128xf32, #tpu.memory_space<vmem>>, vector<1x32x128xf32>
    tpu.vector_store %arg4[%c0_33, %c0_34, %c0_35], %29 {strides = array<i32>} : memref<1x32x128xf32, #tpu.memory_space<vmem>>, vector<1x32x128xf32>,
    %c4_i32 = arith.constant 4 : i32
    %c128_i32_36 = arith.constant 128 : i32
    %31 = arith.muli %c4_i32, %c128_i32_36 : i32
    %32 = tpu.assume_multiple %31, 128 : i32
    %c0_37 = arith.constant 0 : index
    %c0_38 = arith.constant 0 : index
    %c0_39 = arith.constant 0 : index
    %33 = vector.load %arg4[%c0_37, %c0_38, %c0_39] : memref<1x32x128xf32, #tpu.memory_space<vmem>>, vector<1x32x128xf32>
    %c0_40 = arith.constant 0 : index
    %c0_41 = arith.constant 0 : index
    %34 = arith.index_cast %32 : i32 to index
    %35 = vector.load %arg2[%c0_40, %c0_41, %34] : memref<1x32x4096xf32, #tpu.memory_space<vmem>>, vector<1x32x128xf32>
    %36 = arith.addf %33, %35 : vector<1x32x128xf32>
    %c0_42 = arith.constant 0 : index
    %c0_43 = arith.constant 0 : index
    %c0_44 = arith.constant 0 : index
    %37 = vector.load %arg4[%c0_42, %c0_43, %c0_44] : memref<1x32x128xf32, #tpu.memory_space<vmem>>, vector<1x32x128xf32>
    tpu.vector_store %arg4[%c0_42, %c0_43, %c0_44], %36 {strides = array<i32>} : memref<1x32x128xf32, #tpu.memory_space<vmem>>, vector<1x32x128xf32>,
    %c5_i32 = arith.constant 5 : i32
    %c128_i32_45 = arith.constant 128 : i32
    %38 = arith.muli %c5_i32, %c128_i32_45 : i32
    %39 = tpu.assume_multiple %38, 128 : i32
    %c0_46 = arith.constant 0 : index
    %c0_47 = arith.constant 0 : index
    %c0_48 = arith.constant 0 : index
    %40 = vector.load %arg4[%c0_46, %c0_47, %c0_48] : memref<1x32x128xf32, #tpu.memory_space<vmem>>, vector<1x32x128xf32>
    %c0_49 = arith.constant 0 : index
    %c0_50 = arith.constant 0 : index
    %41 = arith.index_cast %39 : i32 to index
    %42 = vector.load %arg2[%c0_49, %c0_50, %41] : memref<1x32x4096xf32, #tpu.memory_space<vmem>>, vector<1x32x128xf32>
    %43 = arith.addf %40, %42 : vector<1x32x128xf32>
    %c0_51 = arith.constant 0 : index
    %c0_52 = arith.constant 0 : index
    %c0_53 = arith.constant 0 : index
    %44 = vector.load %arg4[%c0_51, %c0_52, %c0_53] : memref<1x32x128xf32, #tpu.memory_space<vmem>>, vector<1x32x128xf32>
    tpu.vector_store %arg4[%c0_51, %c0_52, %c0_53], %43 {strides = array<i32>} : memref<1x32x128xf32, #tpu.memory_space<vmem>>, vector<1x32x128xf32>,
    %c6_i32 = arith.constant 6 : i32
    %c128_i32_54 = arith.constant 128 : i32
    %45 = arith.muli %c6_i32, %c128_i32_54 : i32
    %46 = tpu.assume_multiple %45, 128 : i32
    %c0_55 = arith.constant 0 : index
    %c0_56 = arith.constant 0 : index
    %c0_57 = arith.constant 0 : index
    %47 = vector.load %arg4[%c0_55, %c0_56, %c0_57] : memref<1x32x128xf32, #tpu.memory_space<vmem>>, vector<1x32x128xf32>
    %c0_58 = arith.constant 0 : index
    %c0_59 = arith.constant 0 : index
    %48 = arith.index_cast %46 : i32 to index
    %49 = vector.load %arg2[%c0_58, %c0_59, %48] : memref<1x32x4096xf32, #tpu.memory_space<vmem>>, vector<1x32x128xf32>
    %50 = arith.addf %47, %49 : vector<1x32x128xf32>
    %c0_60 = arith.constant 0 : index
    %c0_61 = arith.constant 0 : index
    %c0_62 = arith.constant 0 : index
    %51 = vector.load %arg4[%c0_60, %c0_61, %c0_62] : memref<1x32x128xf32, #tpu.memory_space<vmem>>, vector<1x32x128xf32>
    tpu.vector_store %arg4[%c0_60, %c0_61, %c0_62], %50 {strides = array<i32>} : memref<1x32x128xf32, #tpu.memory_space<vmem>>, vector<1x32x128xf32>,
    %c7_i32 = arith.constant 7 : i32
    %c128_i32_63 = arith.constant 128 : i32
    %52 = arith.muli %c7_i32, %c128_i32_63 : i32
    %53 = tpu.assume_multiple %52, 128 : i32
    %c0_64 = arith.constant 0 : index
    %c0_65 = arith.constant 0 : index
    %c0_66 = arith.constant 0 : index
    %54 = vector.load %arg4[%c0_64, %c0_65, %c0_66] : memref<1x32x128xf32, #tpu.memory_space<vmem>>, vector<1x32x128xf32>
    %c0_67 = arith.constant 0 : index
    %c0_68 = arith.constant 0 : index
    %55 = arith.index_cast %53 : i32 to index
    %56 = vector.load %arg2[%c0_67, %c0_68, %55] : memref<1x32x4096xf32, #tpu.memory_space<vmem>>, vector<1x32x128xf32>
    %57 = arith.addf %54, %56 : vector<1x32x128xf32>
    %c0_69 = arith.constant 0 : index
    %c0_70 = arith.constant 0 : index
    %c0_71 = arith.constant 0 : index
    %58 = vector.load %arg4[%c0_69, %c0_70, %c0_71] : memref<1x32x128xf32, #tpu.memory_space<vmem>>, vector<1x32x128xf32>
    tpu.vector_store %arg4[%c0_69, %c0_70, %c0_71], %57 {strides = array<i32>} : memref<1x32x128xf32, #tpu.memory_space<vmem>>, vector<1x32x128xf32>,
    %c8_i32 = arith.constant 8 : i32
    %c128_i32_72 = arith.constant 128 : i32
    %59 = arith.muli %c8_i32, %c128_i32_72 : i32
    %60 = tpu.assume_multiple %59, 128 : i32
    %c0_73 = arith.constant 0 : index
    %c0_74 = arith.constant 0 : index
    %c0_75 = arith.constant 0 : index
    %61 = vector.load %arg4[%c0_73, %c0_74, %c0_75] : memref<1x32x128xf32, #tpu.memory_space<vmem>>, vector<1x32x128xf32>
    %c0_76 = arith.constant 0 : index
    %c0_77 = arith.constant 0 : index
    %62 = arith.index_cast %60 : i32 to index
    %63 = vector.load %arg2[%c0_76, %c0_77, %62] : memref<1x32x4096xf32, #tpu.memory_space<vmem>>, vector<1x32x128xf32>
    %64 = arith.addf %61, %63 : vector<1x32x128xf32>
    %c0_78 = arith.constant 0 : index
    %c0_79 = arith.constant 0 : index
    %c0_80 = arith.constant 0 : index
    %65 = vector.load %arg4[%c0_78, %c0_79, %c0_80] : memref<1x32x128xf32, #tpu.memory_space<vmem>>, vector<1x32x128xf32>
    tpu.vector_store %arg4[%c0_78, %c0_79, %c0_80], %64 {strides = array<i32>} : memref<1x32x128xf32, #tpu.memory_space<vmem>>, vector<1x32x128xf32>,
    %c9_i32 = arith.constant 9 : i32
    %c128_i32_81 = arith.constant 128 : i32
    %66 = arith.muli %c9_i32, %c128_i32_81 : i32
    %67 = tpu.assume_multiple %66, 128 : i32
    %c0_82 = arith.constant 0 : index
    %c0_83 = arith.constant 0 : index
    %c0_84 = arith.constant 0 : index
    %68 = vector.load %arg4[%c0_82, %c0_83, %c0_84] : memref<1x32x128xf32, #tpu.memory_space<vmem>>, vector<1x32x128xf32>
    %c0_85 = arith.constant 0 : index
    %c0_86 = arith.constant 0 : index
    %69 = arith.index_cast %67 : i32 to index
    %70 = vector.load %arg2[%c0_85, %c0_86, %69] : memref<1x32x4096xf32, #tpu.memory_space<vmem>>, vector<1x32x128xf32>
    %71 = arith.addf %68, %70 : vector<1x32x128xf32>
    %c0_87 = arith.constant 0 : index
    %c0_88 = arith.constant 0 : index
    %c0_89 = arith.constant 0 : index
    %72 = vector.load %arg4[%c0_87, %c0_88, %c0_89] : memref<1x32x128xf32, #tpu.memory_space<vmem>>, vector<1x32x128xf32>
    tpu.vector_store %arg4[%c0_87, %c0_88, %c0_89], %71 {strides = array<i32>} : memref<1x32x128xf32, #tpu.memory_space<vmem>>, vector<1x32x128xf32>,
    %c10_i32 = arith.constant 10 : i32
    %c128_i32_90 = arith.constant 128 : i32
    %73 = arith.muli %c10_i32, %c128_i32_90 : i32
    %74 = tpu.assume_multiple %73, 128 : i32
    %c0_91 = arith.constant 0 : index
    %c0_92 = arith.constant 0 : index
    %c0_93 = arith.constant 0 : index
    %75 = vector.load %arg4[%c0_91, %c0_92, %c0_93] : memref<1x32x128xf32, #tpu.memory_space<vmem>>, vector<1x32x128xf32>
    %c0_94 = arith.constant 0 : index
    %c0_95 = arith.constant 0 : index
    %76 = arith.index_cast %74 : i32 to index
    %77 = vector.load %arg2[%c0_94, %c0_95, %76] : memref<1x32x4096xf32, #tpu.memory_space<vmem>>, vector<1x32x128xf32>
    %78 = arith.addf %75, %77 : vector<1x32x128xf32>
    %c0_96 = arith.constant 0 : index
    %c0_97 = arith.constant 0 : index
    %c0_98 = arith.constant 0 : index
    %79 = vector.load %arg4[%c0_96, %c0_97, %c0_98] : memref<1x32x128xf32, #tpu.memory_space<vmem>>, vector<1x32x128xf32>
    tpu.vector_store %arg4[%c0_96, %c0_97, %c0_98], %78 {strides = array<i32>} : memref<1x32x128xf32, #tpu.memory_space<vmem>>, vector<1x32x128xf32>,
    %c11_i32 = arith.constant 11 : i32
    %c128_i32_99 = arith.constant 128 : i32
    %80 = arith.muli %c11_i32, %c128_i32_99 : i32
    %81 = tpu.assume_multiple %80, 128 : i32
    %c0_100 = arith.constant 0 : index
    %c0_101 = arith.constant 0 : index
    %c0_102 = arith.constant 0 : index
    %82 = vector.load %arg4[%c0_100, %c0_101, %c0_102] : memref<1x32x128xf32, #tpu.memory_space<vmem>>, vector<1x32x128xf32>
    %c0_103 = arith.constant 0 : index
    %c0_104 = arith.constant 0 : index
    %83 = arith.index_cast %81 : i32 to index
    %84 = vector.load %arg2[%c0_103, %c0_104, %83] : memref<1x32x4096xf32, #tpu.memory_space<vmem>>, vector<1x32x128xf32>
    %85 = arith.addf %82, %84 : vector<1x32x128xf32>
    %c0_105 = arith.constant 0 : index
    %c0_106 = arith.constant 0 : index
    %c0_107 = arith.constant 0 : index
    %86 = vector.load %arg4[%c0_105, %c0_106, %c0_107] : memref<1x32x128xf32, #tpu.memory_space<vmem>>, vector<1x32x128xf32>
    tpu.vector_store %arg4[%c0_105, %c0_106, %c0_107], %85 {strides = array<i32>} : memref<1x32x128xf32, #tpu.memory_space<vmem>>, vector<1x32x128xf32>,
    %c12_i32 = arith.constant 12 : i32
    %c128_i32_108 = arith.constant 128 : i32
    %87 = arith.muli %c12_i32, %c128_i32_108 : i32
    %88 = tpu.assume_multiple %87, 128 : i32
    %c0_109 = arith.constant 0 : index
    %c0_110 = arith.constant 0 : index
    %c0_111 = arith.constant 0 : index
    %89 = vector.load %arg4[%c0_109, %c0_110, %c0_111] : memref<1x32x128xf32, #tpu.memory_space<vmem>>, vector<1x32x128xf32>
    %c0_112 = arith.constant 0 : index
    %c0_113 = arith.constant 0 : index
    %90 = arith.index_cast %88 : i32 to index
    %91 = vector.load %arg2[%c0_112, %c0_113, %90] : memref<1x32x4096xf32, #tpu.memory_space<vmem>>, vector<1x32x128xf32>
    %92 = arith.addf %89, %91 : vector<1x32x128xf32>
    %c0_114 = arith.constant 0 : index
    %c0_115 = arith.constant 0 : index
    %c0_116 = arith.constant 0 : index
    %93 = vector.load %arg4[%c0_114, %c0_115, %c0_116] : memref<1x32x128xf32, #tpu.memory_space<vmem>>, vector<1x32x128xf32>
    tpu.vector_store %arg4[%c0_114, %c0_115, %c0_116], %92 {strides = array<i32>} : memref<1x32x128xf32, #tpu.memory_space<vmem>>, vector<1x32x128xf32>,
    %c13_i32 = arith.constant 13 : i32
    %c128_i32_117 = arith.constant 128 : i32
    %94 = arith.muli %c13_i32, %c128_i32_117 : i32
    %95 = tpu.assume_multiple %94, 128 : i32
    %c0_118 = arith.constant 0 : index
    %c0_119 = arith.constant 0 : index
    %c0_120 = arith.constant 0 : index
    %96 = vector.load %arg4[%c0_118, %c0_119, %c0_120] : memref<1x32x128xf32, #tpu.memory_space<vmem>>, vector<1x32x128xf32>
    %c0_121 = arith.constant 0 : index
    %c0_122 = arith.constant 0 : index
    %97 = arith.index_cast %95 : i32 to index
    %98 = vector.load %arg2[%c0_121, %c0_122, %97] : memref<1x32x4096xf32, #tpu.memory_space<vmem>>, vector<1x32x128xf32>
    %99 = arith.addf %96, %98 : vector<1x32x128xf32>
    %c0_123 = arith.constant 0 : index
    %c0_124 = arith.constant 0 : index
    %c0_125 = arith.constant 0 : index
    %100 = vector.load %arg4[%c0_123, %c0_124, %c0_125] : memref<1x32x128xf32, #tpu.memory_space<vmem>>, vector<1x32x128xf32>
    tpu.vector_store %arg4[%c0_123, %c0_124, %c0_125], %99 {strides = array<i32>} : memref<1x32x128xf32, #tpu.memory_space<vmem>>, vector<1x32x128xf32>,
    %c14_i32 = arith.constant 14 : i32
    %c128_i32_126 = arith.constant 128 : i32
    %101 = arith.muli %c14_i32, %c128_i32_126 : i32
    %102 = tpu.assume_multiple %101, 128 : i32
    %c0_127 = arith.constant 0 : index
    %c0_128 = arith.constant 0 : index
    %c0_129 = arith.constant 0 : index
    %103 = vector.load %arg4[%c0_127, %c0_128, %c0_129] : memref<1x32x128xf32, #tpu.memory_space<vmem>>, vector<1x32x128xf32>
    %c0_130 = arith.constant 0 : index
    %c0_131 = arith.constant 0 : index
    %104 = arith.index_cast %102 : i32 to index
    %105 = vector.load %arg2[%c0_130, %c0_131, %104] : memref<1x32x4096xf32, #tpu.memory_space<vmem>>, vector<1x32x128xf32>
    %106 = arith.addf %103, %105 : vector<1x32x128xf32>
    %c0_132 = arith.constant 0 : index
    %c0_133 = arith.constant 0 : index
    %c0_134 = arith.constant 0 : index
    %107 = vector.load %arg4[%c0_132, %c0_133, %c0_134] : memref<1x32x128xf32, #tpu.memory_space<vmem>>, vector<1x32x128xf32>
    tpu.vector_store %arg4[%c0_132, %c0_133, %c0_134], %106 {strides = array<i32>} : memref<1x32x128xf32, #tpu.memory_space<vmem>>, vector<1x32x128xf32>,
    %c15_i32 = arith.constant 15 : i32
    %c128_i32_135 = arith.constant 128 : i32
    %108 = arith.muli %c15_i32, %c128_i32_135 : i32
    %109 = tpu.assume_multiple %108, 128 : i32
    %c0_136 = arith.constant 0 : index
    %c0_137 = arith.constant 0 : index
    %c0_138 = arith.constant 0 : index
    %110 = vector.load %arg4[%c0_136, %c0_137, %c0_138] : memref<1x32x128xf32, #tpu.memory_space<vmem>>, vector<1x32x128xf32>
    %c0_139 = arith.constant 0 : index
    %c0_140 = arith.constant 0 : index
    %111 = arith.index_cast %109 : i32 to index
    %112 = vector.load %arg2[%c0_139, %c0_140, %111] : memref<1x32x4096xf32, #tpu.memory_space<vmem>>, vector<1x32x128xf32>
    %113 = arith.addf %110, %112 : vector<1x32x128xf32>
    %c0_141 = arith.constant 0 : index
    %c0_142 = arith.constant 0 : index
    %c0_143 = arith.constant 0 : index
    %114 = vector.load %arg4[%c0_141, %c0_142, %c0_143] : memref<1x32x128xf32, #tpu.memory_space<vmem>>, vector<1x32x128xf32>
    tpu.vector_store %arg4[%c0_141, %c0_142, %c0_143], %113 {strides = array<i32>} : memref<1x32x128xf32, #tpu.memory_space<vmem>>, vector<1x32x128xf32>,
    %c16_i32 = arith.constant 16 : i32
    %c128_i32_144 = arith.constant 128 : i32
    %115 = arith.muli %c16_i32, %c128_i32_144 : i32
    %116 = tpu.assume_multiple %115, 128 : i32
    %c0_145 = arith.constant 0 : index
    %c0_146 = arith.constant 0 : index
    %c0_147 = arith.constant 0 : index
    %117 = vector.load %arg4[%c0_145, %c0_146, %c0_147] : memref<1x32x128xf32, #tpu.memory_space<vmem>>, vector<1x32x128xf32>
    %c0_148 = arith.constant 0 : index
    %c0_149 = arith.constant 0 : index
    %118 = arith.index_cast %116 : i32 to index
    %119 = vector.load %arg2[%c0_148, %c0_149, %118] : memref<1x32x4096xf32, #tpu.memory_space<vmem>>, vector<1x32x128xf32>
    %120 = arith.addf %117, %119 : vector<1x32x128xf32>
    %c0_150 = arith.constant 0 : index
    %c0_151 = arith.constant 0 : index
    %c0_152 = arith.constant 0 : index
    %121 = vector.load %arg4[%c0_150, %c0_151, %c0_152] : memref<1x32x128xf32, #tpu.memory_space<vmem>>, vector<1x32x128xf32>
    tpu.vector_store %arg4[%c0_150, %c0_151, %c0_152], %120 {strides = array<i32>} : memref<1x32x128xf32, #tpu.memory_space<vmem>>, vector<1x32x128xf32>,
    %c17_i32 = arith.constant 17 : i32
    %c128_i32_153 = arith.constant 128 : i32
    %122 = arith.muli %c17_i32, %c128_i32_153 : i32
    %123 = tpu.assume_multiple %122, 128 : i32
    %c0_154 = arith.constant 0 : index
    %c0_155 = arith.constant 0 : index
    %c0_156 = arith.constant 0 : index
    %124 = vector.load %arg4[%c0_154, %c0_155, %c0_156] : memref<1x32x128xf32, #tpu.memory_space<vmem>>, vector<1x32x128xf32>
    %c0_157 = arith.constant 0 : index
    %c0_158 = arith.constant 0 : index
    %125 = arith.index_cast %123 : i32 to index
    %126 = vector.load %arg2[%c0_157, %c0_158, %125] : memref<1x32x4096xf32, #tpu.memory_space<vmem>>, vector<1x32x128xf32>
    %127 = arith.addf %124, %126 : vector<1x32x128xf32>
    %c0_159 = arith.constant 0 : index
    %c0_160 = arith.constant 0 : index
    %c0_161 = arith.constant 0 : index
    %128 = vector.load %arg4[%c0_159, %c0_160, %c0_161] : memref<1x32x128xf32, #tpu.memory_space<vmem>>, vector<1x32x128xf32>
    tpu.vector_store %arg4[%c0_159, %c0_160, %c0_161], %127 {strides = array<i32>} : memref<1x32x128xf32, #tpu.memory_space<vmem>>, vector<1x32x128xf32>,
    %c18_i32 = arith.constant 18 : i32
    %c128_i32_162 = arith.constant 128 : i32
    %129 = arith.muli %c18_i32, %c128_i32_162 : i32
    %130 = tpu.assume_multiple %129, 128 : i32
    %c0_163 = arith.constant 0 : index
    %c0_164 = arith.constant 0 : index
    %c0_165 = arith.constant 0 : index
    %131 = vector.load %arg4[%c0_163, %c0_164, %c0_165] : memref<1x32x128xf32, #tpu.memory_space<vmem>>, vector<1x32x128xf32>
    %c0_166 = arith.constant 0 : index
    %c0_167 = arith.constant 0 : index
    %132 = arith.index_cast %130 : i32 to index
    %133 = vector.load %arg2[%c0_166, %c0_167, %132] : memref<1x32x4096xf32, #tpu.memory_space<vmem>>, vector<1x32x128xf32>
    %134 = arith.addf %131, %133 : vector<1x32x128xf32>
    %c0_168 = arith.constant 0 : index
    %c0_169 = arith.constant 0 : index
    %c0_170 = arith.constant 0 : index
    %135 = vector.load %arg4[%c0_168, %c0_169, %c0_170] : memref<1x32x128xf32, #tpu.memory_space<vmem>>, vector<1x32x128xf32>
    tpu.vector_store %arg4[%c0_168, %c0_169, %c0_170], %134 {strides = array<i32>} : memref<1x32x128xf32, #tpu.memory_space<vmem>>, vector<1x32x128xf32>,
    %c19_i32 = arith.constant 19 : i32
    %c128_i32_171 = arith.constant 128 : i32
    %136 = arith.muli %c19_i32, %c128_i32_171 : i32
    %137 = tpu.assume_multiple %136, 128 : i32
    %c0_172 = arith.constant 0 : index
    %c0_173 = arith.constant 0 : index
    %c0_174 = arith.constant 0 : index
    %138 = vector.load %arg4[%c0_172, %c0_173, %c0_174] : memref<1x32x128xf32, #tpu.memory_space<vmem>>, vector<1x32x128xf32>
    %c0_175 = arith.constant 0 : index
    %c0_176 = arith.constant 0 : index
    %139 = arith.index_cast %137 : i32 to index
    %140 = vector.load %arg2[%c0_175, %c0_176, %139] : memref<1x32x4096xf32, #tpu.memory_space<vmem>>, vector<1x32x128xf32>
    %141 = arith.addf %138, %140 : vector<1x32x128xf32>
    %c0_177 = arith.constant 0 : index
    %c0_178 = arith.constant 0 : index
    %c0_179 = arith.constant 0 : index
    %142 = vector.load %arg4[%c0_177, %c0_178, %c0_179] : memref<1x32x128xf32, #tpu.memory_space<vmem>>, vector<1x32x128xf32>
    tpu.vector_store %arg4[%c0_177, %c0_178, %c0_179], %141 {strides = array<i32>} : memref<1x32x128xf32, #tpu.memory_space<vmem>>, vector<1x32x128xf32>,
    %c20_i32 = arith.constant 20 : i32
    %c128_i32_180 = arith.constant 128 : i32
    %143 = arith.muli %c20_i32, %c128_i32_180 : i32
    %144 = tpu.assume_multiple %143, 128 : i32
    %c0_181 = arith.constant 0 : index
    %c0_182 = arith.constant 0 : index
    %c0_183 = arith.constant 0 : index
    %145 = vector.load %arg4[%c0_181, %c0_182, %c0_183] : memref<1x32x128xf32, #tpu.memory_space<vmem>>, vector<1x32x128xf32>
    %c0_184 = arith.constant 0 : index
    %c0_185 = arith.constant 0 : index
    %146 = arith.index_cast %144 : i32 to index
    %147 = vector.load %arg2[%c0_184, %c0_185, %146] : memref<1x32x4096xf32, #tpu.memory_space<vmem>>, vector<1x32x128xf32>
    %148 = arith.addf %145, %147 : vector<1x32x128xf32>
    %c0_186 = arith.constant 0 : index
    %c0_187 = arith.constant 0 : index
    %c0_188 = arith.constant 0 : index
    %149 = vector.load %arg4[%c0_186, %c0_187, %c0_188] : memref<1x32x128xf32, #tpu.memory_space<vmem>>, vector<1x32x128xf32>
    tpu.vector_store %arg4[%c0_186, %c0_187, %c0_188], %148 {strides = array<i32>} : memref<1x32x128xf32, #tpu.memory_space<vmem>>, vector<1x32x128xf32>,
    %c21_i32 = arith.constant 21 : i32
    %c128_i32_189 = arith.constant 128 : i32
    %150 = arith.muli %c21_i32, %c128_i32_189 : i32
    %151 = tpu.assume_multiple %150, 128 : i32
    %c0_190 = arith.constant 0 : index
    %c0_191 = arith.constant 0 : index
    %c0_192 = arith.constant 0 : index
    %152 = vector.load %arg4[%c0_190, %c0_191, %c0_192] : memref<1x32x128xf32, #tpu.memory_space<vmem>>, vector<1x32x128xf32>
    %c0_193 = arith.constant 0 : index
    %c0_194 = arith.constant 0 : index
    %153 = arith.index_cast %151 : i32 to index
    %154 = vector.load %arg2[%c0_193, %c0_194, %153] : memref<1x32x4096xf32, #tpu.memory_space<vmem>>, vector<1x32x128xf32>
    %155 = arith.addf %152, %154 : vector<1x32x128xf32>
    %c0_195 = arith.constant 0 : index
    %c0_196 = arith.constant 0 : index
    %c0_197 = arith.constant 0 : index
    %156 = vector.load %arg4[%c0_195, %c0_196, %c0_197] : memref<1x32x128xf32, #tpu.memory_space<vmem>>, vector<1x32x128xf32>
    tpu.vector_store %arg4[%c0_195, %c0_196, %c0_197], %155 {strides = array<i32>} : memref<1x32x128xf32, #tpu.memory_space<vmem>>, vector<1x32x128xf32>,
    %c22_i32 = arith.constant 22 : i32
    %c128_i32_198 = arith.constant 128 : i32
    %157 = arith.muli %c22_i32, %c128_i32_198 : i32
    %158 = tpu.assume_multiple %157, 128 : i32
    %c0_199 = arith.constant 0 : index
    %c0_200 = arith.constant 0 : index
    %c0_201 = arith.constant 0 : index
    %159 = vector.load %arg4[%c0_199, %c0_200, %c0_201] : memref<1x32x128xf32, #tpu.memory_space<vmem>>, vector<1x32x128xf32>
    %c0_202 = arith.constant 0 : index
    %c0_203 = arith.constant 0 : index
    %160 = arith.index_cast %158 : i32 to index
    %161 = vector.load %arg2[%c0_202, %c0_203, %160] : memref<1x32x4096xf32, #tpu.memory_space<vmem>>, vector<1x32x128xf32>
    %162 = arith.addf %159, %161 : vector<1x32x128xf32>
    %c0_204 = arith.constant 0 : index
    %c0_205 = arith.constant 0 : index
    %c0_206 = arith.constant 0 : index
    %163 = vector.load %arg4[%c0_204, %c0_205, %c0_206] : memref<1x32x128xf32, #tpu.memory_space<vmem>>, vector<1x32x128xf32>
    tpu.vector_store %arg4[%c0_204, %c0_205, %c0_206], %162 {strides = array<i32>} : memref<1x32x128xf32, #tpu.memory_space<vmem>>, vector<1x32x128xf32>,
    %c23_i32 = arith.constant 23 : i32
    %c128_i32_207 = arith.constant 128 : i32
    %164 = arith.muli %c23_i32, %c128_i32_207 : i32
    %165 = tpu.assume_multiple %164, 128 : i32
    %c0_208 = arith.constant 0 : index
    %c0_209 = arith.constant 0 : index
    %c0_210 = arith.constant 0 : index
    %166 = vector.load %arg4[%c0_208, %c0_209, %c0_210] : memref<1x32x128xf32, #tpu.memory_space<vmem>>, vector<1x32x128xf32>
    %c0_211 = arith.constant 0 : index
    %c0_212 = arith.constant 0 : index
    %167 = arith.index_cast %165 : i32 to index
    %168 = vector.load %arg2[%c0_211, %c0_212, %167] : memref<1x32x4096xf32, #tpu.memory_space<vmem>>, vector<1x32x128xf32>
    %169 = arith.addf %166, %168 : vector<1x32x128xf32>
    %c0_213 = arith.constant 0 : index
    %c0_214 = arith.constant 0 : index
    %c0_215 = arith.constant 0 : index
    %170 = vector.load %arg4[%c0_213, %c0_214, %c0_215] : memref<1x32x128xf32, #tpu.memory_space<vmem>>, vector<1x32x128xf32>
    tpu.vector_store %arg4[%c0_213, %c0_214, %c0_215], %169 {strides = array<i32>} : memref<1x32x128xf32, #tpu.memory_space<vmem>>, vector<1x32x128xf32>,
    %c24_i32 = arith.constant 24 : i32
    %c128_i32_216 = arith.constant 128 : i32
    %171 = arith.muli %c24_i32, %c128_i32_216 : i32
    %172 = tpu.assume_multiple %171, 128 : i32
    %c0_217 = arith.constant 0 : index
    %c0_218 = arith.constant 0 : index
    %c0_219 = arith.constant 0 : index
    %173 = vector.load %arg4[%c0_217, %c0_218, %c0_219] : memref<1x32x128xf32, #tpu.memory_space<vmem>>, vector<1x32x128xf32>
    %c0_220 = arith.constant 0 : index
    %c0_221 = arith.constant 0 : index
    %174 = arith.index_cast %172 : i32 to index
    %175 = vector.load %arg2[%c0_220, %c0_221, %174] : memref<1x32x4096xf32, #tpu.memory_space<vmem>>, vector<1x32x128xf32>
    %176 = arith.addf %173, %175 : vector<1x32x128xf32>
    %c0_222 = arith.constant 0 : index
    %c0_223 = arith.constant 0 : index
    %c0_224 = arith.constant 0 : index
    %177 = vector.load %arg4[%c0_222, %c0_223, %c0_224] : memref<1x32x128xf32, #tpu.memory_space<vmem>>, vector<1x32x128xf32>
    tpu.vector_store %arg4[%c0_222, %c0_223, %c0_224], %176 {strides = array<i32>} : memref<1x32x128xf32, #tpu.memory_space<vmem>>, vector<1x32x128xf32>,
    %c25_i32 = arith.constant 25 : i32
    %c128_i32_225 = arith.constant 128 : i32
    %178 = arith.muli %c25_i32, %c128_i32_225 : i32
    %179 = tpu.assume_multiple %178, 128 : i32
    %c0_226 = arith.constant 0 : index
    %c0_227 = arith.constant 0 : index
    %c0_228 = arith.constant 0 : index
    %180 = vector.load %arg4[%c0_226, %c0_227, %c0_228] : memref<1x32x128xf32, #tpu.memory_space<vmem>>, vector<1x32x128xf32>
    %c0_229 = arith.constant 0 : index
    %c0_230 = arith.constant 0 : index
    %181 = arith.index_cast %179 : i32 to index
    %182 = vector.load %arg2[%c0_229, %c0_230, %181] : memref<1x32x4096xf32, #tpu.memory_space<vmem>>, vector<1x32x128xf32>
    %183 = arith.addf %180, %182 : vector<1x32x128xf32>
    %c0_231 = arith.constant 0 : index
    %c0_232 = arith.constant 0 : index
    %c0_233 = arith.constant 0 : index
    %184 = vector.load %arg4[%c0_231, %c0_232, %c0_233] : memref<1x32x128xf32, #tpu.memory_space<vmem>>, vector<1x32x128xf32>
    tpu.vector_store %arg4[%c0_231, %c0_232, %c0_233], %183 {strides = array<i32>} : memref<1x32x128xf32, #tpu.memory_space<vmem>>, vector<1x32x128xf32>,
    %c26_i32 = arith.constant 26 : i32
    %c128_i32_234 = arith.constant 128 : i32
    %185 = arith.muli %c26_i32, %c128_i32_234 : i32
    %186 = tpu.assume_multiple %185, 128 : i32
    %c0_235 = arith.constant 0 : index
    %c0_236 = arith.constant 0 : index
    %c0_237 = arith.constant 0 : index
    %187 = vector.load %arg4[%c0_235, %c0_236, %c0_237] : memref<1x32x128xf32, #tpu.memory_space<vmem>>, vector<1x32x128xf32>
    %c0_238 = arith.constant 0 : index
    %c0_239 = arith.constant 0 : index
    %188 = arith.index_cast %186 : i32 to index
    %189 = vector.load %arg2[%c0_238, %c0_239, %188] : memref<1x32x4096xf32, #tpu.memory_space<vmem>>, vector<1x32x128xf32>
    %190 = arith.addf %187, %189 : vector<1x32x128xf32>
    %c0_240 = arith.constant 0 : index
    %c0_241 = arith.constant 0 : index
    %c0_242 = arith.constant 0 : index
    %191 = vector.load %arg4[%c0_240, %c0_241, %c0_242] : memref<1x32x128xf32, #tpu.memory_space<vmem>>, vector<1x32x128xf32>
    tpu.vector_store %arg4[%c0_240, %c0_241, %c0_242], %190 {strides = array<i32>} : memref<1x32x128xf32, #tpu.memory_space<vmem>>, vector<1x32x128xf32>,
    %c27_i32 = arith.constant 27 : i32
    %c128_i32_243 = arith.constant 128 : i32
    %192 = arith.muli %c27_i32, %c128_i32_243 : i32
    %193 = tpu.assume_multiple %192, 128 : i32
    %c0_244 = arith.constant 0 : index
    %c0_245 = arith.constant 0 : index
    %c0_246 = arith.constant 0 : index
    %194 = vector.load %arg4[%c0_244, %c0_245, %c0_246] : memref<1x32x128xf32, #tpu.memory_space<vmem>>, vector<1x32x128xf32>
    %c0_247 = arith.constant 0 : index
    %c0_248 = arith.constant 0 : index
    %195 = arith.index_cast %193 : i32 to index
    %196 = vector.load %arg2[%c0_247, %c0_248, %195] : memref<1x32x4096xf32, #tpu.memory_space<vmem>>, vector<1x32x128xf32>
    %197 = arith.addf %194, %196 : vector<1x32x128xf32>
    %c0_249 = arith.constant 0 : index
    %c0_250 = arith.constant 0 : index
    %c0_251 = arith.constant 0 : index
    %198 = vector.load %arg4[%c0_249, %c0_250, %c0_251] : memref<1x32x128xf32, #tpu.memory_space<vmem>>, vector<1x32x128xf32>
    tpu.vector_store %arg4[%c0_249, %c0_250, %c0_251], %197 {strides = array<i32>} : memref<1x32x128xf32, #tpu.memory_space<vmem>>, vector<1x32x128xf32>,
    %c28_i32 = arith.constant 28 : i32
    %c128_i32_252 = arith.constant 128 : i32
    %199 = arith.muli %c28_i32, %c128_i32_252 : i32
    %200 = tpu.assume_multiple %199, 128 : i32
    %c0_253 = arith.constant 0 : index
    %c0_254 = arith.constant 0 : index
    %c0_255 = arith.constant 0 : index
    %201 = vector.load %arg4[%c0_253, %c0_254, %c0_255] : memref<1x32x128xf32, #tpu.memory_space<vmem>>, vector<1x32x128xf32>
    %c0_256 = arith.constant 0 : index
    %c0_257 = arith.constant 0 : index
    %202 = arith.index_cast %200 : i32 to index
    %203 = vector.load %arg2[%c0_256, %c0_257, %202] : memref<1x32x4096xf32, #tpu.memory_space<vmem>>, vector<1x32x128xf32>
    %204 = arith.addf %201, %203 : vector<1x32x128xf32>
    %c0_258 = arith.constant 0 : index
    %c0_259 = arith.constant 0 : index
    %c0_260 = arith.constant 0 : index
    %205 = vector.load %arg4[%c0_258, %c0_259, %c0_260] : memref<1x32x128xf32, #tpu.memory_space<vmem>>, vector<1x32x128xf32>
    tpu.vector_store %arg4[%c0_258, %c0_259, %c0_260], %204 {strides = array<i32>} : memref<1x32x128xf32, #tpu.memory_space<vmem>>, vector<1x32x128xf32>,
    %c29_i32 = arith.constant 29 : i32
    %c128_i32_261 = arith.constant 128 : i32
    %206 = arith.muli %c29_i32, %c128_i32_261 : i32
    %207 = tpu.assume_multiple %206, 128 : i32
    %c0_262 = arith.constant 0 : index
    %c0_263 = arith.constant 0 : index
    %c0_264 = arith.constant 0 : index
    %208 = vector.load %arg4[%c0_262, %c0_263, %c0_264] : memref<1x32x128xf32, #tpu.memory_space<vmem>>, vector<1x32x128xf32>
    %c0_265 = arith.constant 0 : index
    %c0_266 = arith.constant 0 : index
    %209 = arith.index_cast %207 : i32 to index
    %210 = vector.load %arg2[%c0_265, %c0_266, %209] : memref<1x32x4096xf32, #tpu.memory_space<vmem>>, vector<1x32x128xf32>
    %211 = arith.addf %208, %210 : vector<1x32x128xf32>
    %c0_267 = arith.constant 0 : index
    %c0_268 = arith.constant 0 : index
    %c0_269 = arith.constant 0 : index
    %212 = vector.load %arg4[%c0_267, %c0_268, %c0_269] : memref<1x32x128xf32, #tpu.memory_space<vmem>>, vector<1x32x128xf32>
    tpu.vector_store %arg4[%c0_267, %c0_268, %c0_269], %211 {strides = array<i32>} : memref<1x32x128xf32, #tpu.memory_space<vmem>>, vector<1x32x128xf32>,
    %c30_i32 = arith.constant 30 : i32
    %c128_i32_270 = arith.constant 128 : i32
    %213 = arith.muli %c30_i32, %c128_i32_270 : i32
    %214 = tpu.assume_multiple %213, 128 : i32
    %c0_271 = arith.constant 0 : index
    %c0_272 = arith.constant 0 : index
    %c0_273 = arith.constant 0 : index
    %215 = vector.load %arg4[%c0_271, %c0_272, %c0_273] : memref<1x32x128xf32, #tpu.memory_space<vmem>>, vector<1x32x128xf32>
    %c0_274 = arith.constant 0 : index
    %c0_275 = arith.constant 0 : index
    %216 = arith.index_cast %214 : i32 to index
    %217 = vector.load %arg2[%c0_274, %c0_275, %216] : memref<1x32x4096xf32, #tpu.memory_space<vmem>>, vector<1x32x128xf32>
    %218 = arith.addf %215, %217 : vector<1x32x128xf32>
    %c0_276 = arith.constant 0 : index
    %c0_277 = arith.constant 0 : index
    %c0_278 = arith.constant 0 : index
    %219 = vector.load %arg4[%c0_276, %c0_277, %c0_278] : memref<1x32x128xf32, #tpu.memory_space<vmem>>, vector<1x32x128xf32>
    tpu.vector_store %arg4[%c0_276, %c0_277, %c0_278], %218 {strides = array<i32>} : memref<1x32x128xf32, #tpu.memory_space<vmem>>, vector<1x32x128xf32>,
    %c31_i32 = arith.constant 31 : i32
    %c128_i32_279 = arith.constant 128 : i32
    %220 = arith.muli %c31_i32, %c128_i32_279 : i32
    %221 = tpu.assume_multiple %220, 128 : i32
    %c0_280 = arith.constant 0 : index
    %c0_281 = arith.constant 0 : index
    %c0_282 = arith.constant 0 : index
    %222 = vector.load %arg4[%c0_280, %c0_281, %c0_282] : memref<1x32x128xf32, #tpu.memory_space<vmem>>, vector<1x32x128xf32>
    %c0_283 = arith.constant 0 : index
    %c0_284 = arith.constant 0 : index
    %223 = arith.index_cast %221 : i32 to index
    %224 = vector.load %arg2[%c0_283, %c0_284, %223] : memref<1x32x4096xf32, #tpu.memory_space<vmem>>, vector<1x32x128xf32>
    %225 = arith.addf %222, %224 : vector<1x32x128xf32>
    %c0_285 = arith.constant 0 : index
    %c0_286 = arith.constant 0 : index
    %c0_287 = arith.constant 0 : index
    %226 = vector.load %arg4[%c0_285, %c0_286, %c0_287] : memref<1x32x128xf32, #tpu.memory_space<vmem>>, vector<1x32x128xf32>
    tpu.vector_store %arg4[%c0_285, %c0_286, %c0_287], %225 {strides = array<i32>} : memref<1x32x128xf32, #tpu.memory_space<vmem>>, vector<1x32x128xf32>,
    %c32_i32 = arith.constant 32 : i32
    %c3_i32_288 = arith.constant 3 : i32
    %227 = arith.cmpi eq, %arg1, %c3_i32_288 : i32
    %228 = arith.extui %227 : i1 to i32
    %c0_i32_289 = arith.constant 0 : i32
    %229 = arith.cmpi ne, %228, %c0_i32_289 : i32
    scf.if %229 {
      %c0_290 = arith.constant 0 : index
      %c0_291 = arith.constant 0 : index
      %c0_292 = arith.constant 0 : index
      %230 = vector.load %arg4[%c0_290, %c0_291, %c0_292] : memref<1x32x128xf32, #tpu.memory_space<vmem>>, vector<1x32x128xf32>
      %cst = arith.constant dense<0.000000e+00> : vector<1x32xf32>
      %231 = vector.multi_reduction <add>, %230, %cst [2] : vector<1x32x128xf32> to vector<1x32xf32>
      %cst_293 = arith.constant 6.10351563E-5 : f32
      %232 = vector.broadcast %cst_293 : f32 to vector<1x32xf32>
      %233 = arith.mulf %231, %232 : vector<1x32xf32>
      %234 = vector.shape_cast %233 : vector<1x32xf32> to vector<1x1x32xf32>
      %c0_294 = arith.constant 0 : index
      %c0_295 = arith.constant 0 : index
      %c0_296 = arith.constant 0 : index
      %235 = vector.load %arg3[%c0_294, %c0_295, %c0_296] : memref<1x1x32xf32, #tpu.memory_space<vmem>>, vector<1x1x32xf32>
      tpu.vector_store %arg3[%c0_294, %c0_295, %c0_296], %234 {strides = array<i32>} : memref<1x1x32xf32, #tpu.memory_space<vmem>>, vector<1x1x32xf32>,
    } else {
    }
    return
  }
  func.func @transform_0(%arg0: i32, %arg1: i32) -> (i32, i32, i32) {
    %c0_i32 = arith.constant 0 : i32
    %c0_i32_0 = arith.constant 0 : i32
    return %arg0, %c0_i32, %arg1 : i32, i32, i32
  }
  func.func @transform_1(%arg0: i32, %arg1: i32) -> (i32, i32, i32) {
    %c0_i32 = arith.constant 0 : i32
    %c0_i32_0 = arith.constant 0 : i32
    %c0_i32_1 = arith.constant 0 : i32
    return %arg0, %c0_i32, %c0_i32_0 : i32, i32, i32
  }
}

</mosaic_0001>

<llo_original>
// kernel: tpu_custom_call.1
$region0: #{tpu_custom_call.1}
  #allocation0 [shape = 'u32[]', space=smem, size = 0x4, offset = 0x4, fixed_abs, tag = 'smem constant byte address 0x4 - core index']
  #allocation1 [shape = 'u32[144,128]{1,0:T(1,128)}', space=vmem, size = 0x12000, scoped, tag = 'internal scratch']
  #allocation2 [shape = 'f32[1,32,128]{2,1,0:T(8,128)}', space=vmem, size = 0x4000, scoped, tag = 'scratch operand']
  %s0 = inlined_call_operand.hbm [shape: f32[2,32,16384], index: 0, kind: input, shape index: {}]
  %s1 = inlined_call_operand.hbm [shape: f32[2,1,32], index: 1, kind: output, shape index: {}]
  %s2 = sld [smem:[#allocation0]]
  $region49: #{tpu_custom_call.1} parent=0
    _
  %s4 = ssub.s32 1, %s2
  %s5 = scalar_select 0, %s4, %s2
  $region1: #{tpu_custom_call.1} parent=0
    #allocation3 [shape = 'u8[1048576]{0}', space=vmem, size = 0x100000, scoped, tag = 'input window, operand 0']
    #allocation4 [shape = 's32[2]{0}', space=sflag, size = 0x8, scoped, tag = 'scoped memory for tpu_custom_call.1']
    #allocation5 [shape = 's32[2]{0}', space=sflag, size = 0x8, scoped, tag = 'scoped memory for tpu_custom_call.1']
    #allocation6 [shape = 'u8[1024]{0}', space=vmem, size = 0x400, scoped, tag = 'output window, operand 0']
    %6 = vsyncpa [#allocation4], 0
    %s7 = scalar_lea.sflag [#allocation4], 1
    %8 = vsyncpa %s7, 0
    %9 = vsyncpa [#allocation5], 0
    %s10 = scalar_lea.sflag [#allocation5], 1
    %11 = vsyncpa %s10, 0
    loop: start=0, step=1, limit=10
    $region2: #{tpu_custom_call.1} parent=1 // loop_pre_header
      _
    $region3: #{tpu_custom_call.1} parent=1 // loop_header
      %s13 = sphi 0, %s17
      %p14 = scmp.ge.s32.totalorder %s13, 10
      %s20 = sphi 0, %s32
      %s21 = sphi 0, %s28
      %s22 = sphi 0, %s20
      %s23 = sphi 0, %s21
      %s24 = sphi 0, %s22
      %s25 = sphi 0, %s23
      %s37 = sphi 0, %s39
      %s40 = sphi 0, %s37
      %s41 = sphi 0, %s40
      %s57 = sphi 0, %s41
      %s63 = sphi 0, %s65
      %s66 = sphi 0, %s63
      %s67 = sphi 0, %s66
      %s83 = sphi 0, %s67
    $region4: #{tpu_custom_call.1} parent=1 // loop_header_branch
      %16 = sbr.rel (%p14) target = $region8
    $region5: #{tpu_custom_call.1} parent=1 // loop_body
      %s18 = ssub.s32 %s13, 1
      %s19 = ssub.s32 %s13, 2
      %s26 = sadd.s32 1, %s21
      %p27 = scmp.ge.s32.totalorder %s26, 4
      %s28 = scalar_select %p27, 0, %s26
      %s29 = sadd.s32 1, %s20
      %s30 = scalar_select %p27, %s29, %s20
      %p31 = scmp.ge.s32.totalorder %s30, 2
      %s32 = scalar_select %p31, 0, %s30
      %s33 = ssub.s32 %s20, %s32
      %s34 = ssub.s32 %s21, %s28
      %s35 = sor.u32 %s33, %s34
      %p36 = scmp.eq.s32.totalorder %s35, 0
      %s38 = sadd.s32 %s37, 1
      %s39 = scalar_select %p36, %s37, %s38
      %p42 = pneg %p36
      %p43 = scmp.eq.s32.totalorder %s13, 7
      %p44 = por %p42, %p43
      %p45 = scmp.ne.s32.totalorder %s37, %s40
      %p46 = scmp.eq.s32.totalorder %s13, 0
      %p47 = por %p45, %p46
      %p48 = scmp.ne.s32.totalorder %s37, %s40
      %p49 = scmp.eq.s32.totalorder %s18, 7
      %p50 = por %p48, %p49
      %p51 = scmp.ne.s32.totalorder %s40, %s41
      %p52 = scmp.eq.s32.totalorder %s18, 0
      %p53 = por %p51, %p52
      %p54 = scmp.ne.s32.totalorder %s40, %s41
      %p55 = scmp.eq.s32.totalorder %s19, 7
      %p56 = por %p54, %p55
      %p58 = scmp.ne.s32.totalorder %s41, %s57
      %p59 = scmp.eq.s32.totalorder %s19, 0
      %p60 = por %p58, %p59
      %s61 = ssub.s32 %s20, %s32
      %p62 = scmp.eq.s32.totalorder %s61, 0
      %s64 = sadd.s32 %s63, 1
      %s65 = scalar_select %p62, %s63, %s64
      %p68 = pneg %p62
      %p69 = scmp.eq.s32.totalorder %s13, 7
      %p70 = por %p68, %p69
      %p71 = scmp.ne.s32.totalorder %s63, %s66
      %p72 = scmp.eq.s32.totalorder %s13, 0
      %p73 = por %p71, %p72
      %p74 = scmp.ne.s32.totalorder %s63, %s66
      %p75 = scmp.eq.s32.totalorder %s18, 7
      %p76 = por %p74, %p75
      %p77 = scmp.ne.s32.totalorder %s66, %s67
      %p78 = scmp.eq.s32.totalorder %s18, 0
      %p79 = por %p77, %p78
      %p80 = scmp.ne.s32.totalorder %s66, %s67
      %p81 = scmp.eq.s32.totalorder %s19, 7
      %p82 = por %p80, %p81
      %p84 = scmp.ne.s32.totalorder %s67, %s83
      %p85 = scmp.eq.s32.totalorder %s19, 0
      %p86 = por %p84, %p85
      %p87 = scmp.le.s32.totalorder 1, %s13
      %p88 = scmp.lt.s32.totalorder %s13, 9
      %p89 = pnand %p87, %p88
      %p90 = pneg %p89
      // Predicated region
      $region9: #{tpu_custom_call.1} parent=5 // pred_check
        _
      $region10: #{tpu_custom_call.1} parent=5 // pred_check_branch
        %92 = sbr.rel (%p89) target = $region12
      $region11: #{tpu_custom_call.1} parent=5 // pred_region
        %s93 = ssub.s32 %s13, 1
      $region12: #{tpu_custom_call.1} parent=5 // pred_fallthru
        _
      %p94 = scmp.lt.s32.totalorder %s13, 8
      // Predicated region
      $region13: #{tpu_custom_call.1} parent=5 // pred_check
        %p95 = pneg %p94
      $region14: #{tpu_custom_call.1} parent=5 // pred_check_branch
        %97 = sbr.rel (%p95) target = $region16
      $region15: #{tpu_custom_call.1} parent=5 // pred_region
        // Predicated region
        $region17: #{tpu_custom_call.1} parent=15 // pred_check
          %p98 = pneg %p47
        $region18: #{tpu_custom_call.1} parent=15 // pred_check_branch
          %100 = sbr.rel (%p98) target = $region20
        $region19: #{tpu_custom_call.1} parent=15 // pred_region
          %s101 = sand.u32 %s37, 1
          %s102 = scalar_lea.sflag [#allocation4], %s101
          %s103 = sand.u32 %s37, 1
          %s104 = smul.addr %s103, 1024
          %s105 = scalar_lea.vmem [#allocation3], %s104
          %s106 = smul.u32 32, %s21
          %s108 = ssub.s32 16384, 16384
          %109 = vsyncadd %s102, %s108
          %s110 = smul.addr %s20, 512
          %s111 = sadd.s32 %s106, %s110
          %s112 = smul.addr %s111, 128
          %s113 = scalar_lea.hbm %s0, %s112
          %s114 = sshll.u32 %s105, 4
          %s115 = int_to_ptr.vmem [resolvable:$true] %s114
          %120 = dma.hbm_to_vmem [thread:$0]  %s113, 16384, %s115, %s102, 16384, 4096, 256
        $region20: #{tpu_custom_call.1} parent=15 // pred_fallthru
          _
      $region16: #{tpu_custom_call.1} parent=5 // pred_fallthru
        _
      %p121 = scmp.le.s32.totalorder 1, %s13
      %p122 = scmp.lt.s32.totalorder %s13, 9
      %p123 = pnand %p121, %p122
      %p124 = pneg %p123
      // Predicated region
      $region21: #{tpu_custom_call.1} parent=5 // pred_check
        _
      $region22: #{tpu_custom_call.1} parent=5 // pred_check_branch
        %126 = sbr.rel (%p123) target = $region24
      $region23: #{tpu_custom_call.1} parent=5 // pred_region
        %s127 = ssub.s32 %s13, 1
        %s128 = sand.u32 %s40, 1
        %s129 = scalar_lea.sflag [#allocation4], %s128
        %s130 = sand.u32 %s40, 1
        %s131 = smul.addr %s130, 1024
        %s132 = scalar_lea.vmem [#allocation3], %s131
        // Predicated region
        $region25: #{tpu_custom_call.1} parent=23 // pred_check
          %p133 = pneg %p53
        $region26: #{tpu_custom_call.1} parent=23 // pred_check_branch
          %135 = sbr.rel (%p133) target = $region28
        $region27: #{tpu_custom_call.1} parent=23 // pred_region
          %136 = dma.done %s129, 16384
        $region28: #{tpu_custom_call.1} parent=23 // pred_fallthru
          _
        %s137 = sand.u32 %s40, 1
        %s138 = scalar_lea.sflag [#allocation4], %s137
        %s139 = sand.u32 %s40, 1
        %s140 = smul.addr %s139, 1024
        %s141 = scalar_lea.vmem [#allocation3], %s140
        %p142 = pneg %p53
        %p143 = pneg %p50
        %p144 = pneg %p79
        %p145 = pneg %p76
        %s146 = sand.u32 %s66, 1
        %s147 = scalar_lea.sflag [#allocation5], %s146
        %s148 = sand.u32 %s66, 1
        %s149 = scalar_lea.vmem [#allocation6], %s148
        %s150 = smul.u32 32, %s23
        %p151 = scmp.eq.s32.totalorder %s23, 0
        // Predicated region
        $region29: #{tpu_custom_call.1} parent=23 // pred_check
          %p152 = pneg %p151
        $region30: #{tpu_custom_call.1} parent=23 // pred_check_branch
          %154 = sbr.rel (%p152) target = $region32
        $region31: #{tpu_custom_call.1} parent=23 // pred_region
          %155 = vst [vmem:[#allocation2] sm:$0xff] 0.0
          %156 = vst [vmem:[#allocation2 + $0x8] sm:$0xff] 0.0
          %157 = vst [vmem:[#allocation2 + $0x10] sm:$0xff] 0.0
          %158 = vst [vmem:[#allocation2 + $0x18] sm:$0xff] 0.0
        $region32: #{tpu_custom_call.1} parent=23 // pred_fallthru
          _
        %v159 = vld [vmem:[#allocation2] sm:$0xff]
        %v160 = vld [vmem:[#allocation2 + $0x8] sm:$0xff]
        %v161 = vld [vmem:[#allocation2 + $0x10] sm:$0xff]
        %v162 = vld [vmem:[#allocation2 + $0x18] sm:$0xff]
        %v163 = vld [vmem:[%s132] sm:$0xff]
        %v164 = vld [vmem:[%s132 + $0x100] sm:$0xff]
        %v165 = vld [vmem:[%s132 + $0x200] sm:$0xff]
        %v166 = vld [vmem:[%s132 + $0x300] sm:$0xff]
        %v167 = vadd.f32 %v159, %v163
        %v168 = vadd.f32 %v160, %v164
        %v169 = vadd.f32 %v161, %v165
        %v170 = vadd.f32 %v162, %v166
        %171 = vst [vmem:[#allocation2] sm:$0xff] %v167
        %172 = vst [vmem:[#allocation2 + $0x8] sm:$0xff] %v168
        %173 = vst [vmem:[#allocation2 + $0x10] sm:$0xff] %v169
        %174 = vst [vmem:[#allocation2 + $0x18] sm:$0xff] %v170
        %v175 = vld [vmem:[#allocation2] sm:$0xff]
        %v176 = vld [vmem:[#allocation2 + $0x8] sm:$0xff]
        %v177 = vld [vmem:[#allocation2 + $0x10] sm:$0xff]
        %v178 = vld [vmem:[#allocation2 + $0x18] sm:$0xff]
        %s179 = scalar_lea.vmem %s132, 8 [#allocation3]
        %v180 = vld [vmem:[%s179] sm:$0xff]
        %v181 = vld [vmem:[%s179 + $0x100] sm:$0xff]
        %v182 = vld [vmem:[%s179 + $0x200] sm:$0xff]
        %v183 = vld [vmem:[%s179 + $0x300] sm:$0xff]
        %v184 = vadd.f32 %v175, %v180
        %v185 = vadd.f32 %v176, %v181
        %v186 = vadd.f32 %v177, %v182
        %v187 = vadd.f32 %v178, %v183
        %188 = vst [vmem:[#allocation2] sm:$0xff] %v184
        %189 = vst [vmem:[#allocation2 + $0x8] sm:$0xff] %v185
        %190 = vst [vmem:[#allocation2 + $0x10] sm:$0xff] %v186
        %191 = vst [vmem:[#allocation2 + $0x18] sm:$0xff] %v187
        %v192 = vld [vmem:[#allocation2] sm:$0xff]
        %v193 = vld [vmem:[#allocation2 + $0x8] sm:$0xff]
        %v194 = vld [vmem:[#allocation2 + $0x10] sm:$0xff]
        %v195 = vld [vmem:[#allocation2 + $0x18] sm:$0xff]
        %s196 = scalar_lea.vmem %s132, 16 [#allocation3]
        %v197 = vld [vmem:[%s196] sm:$0xff]
        %v198 = vld [vmem:[%s196 + $0x100] sm:$0xff]
        %v199 = vld [vmem:[%s196 + $0x200] sm:$0xff]
        %v200 = vld [vmem:[%s196 + $0x300] sm:$0xff]
        %v201 = vadd.f32 %v192, %v197
        %v202 = vadd.f32 %v193, %v198
        %v203 = vadd.f32 %v194, %v199
        %v204 = vadd.f32 %v195, %v200
        %205 = vst [vmem:[#allocation2] sm:$0xff] %v201
        %206 = vst [vmem:[#allocation2 + $0x8] sm:$0xff] %v202
        %207 = vst [vmem:[#allocation2 + $0x10] sm:$0xff] %v203
        %208 = vst [vmem:[#allocation2 + $0x18] sm:$0xff] %v204
        %v209 = vld [vmem:[#allocation2] sm:$0xff]
        %v210 = vld [vmem:[#allocation2 + $0x8] sm:$0xff]
        %v211 = vld [vmem:[#allocation2 + $0x10] sm:$0xff]
        %v212 = vld [vmem:[#allocation2 + $0x18] sm:$0xff]
        %s213 = scalar_lea.vmem %s132, 24 [#allocation3]
        %v214 = vld [vmem:[%s213] sm:$0xff]
        %v215 = vld [vmem:[%s213 + $0x100] sm:$0xff]
        %v216 = vld [vmem:[%s213 + $0x200] sm:$0xff]
        %v217 = vld [vmem:[%s213 + $0x300] sm:$0xff]
        %v218 = vadd.f32 %v209, %v214
        %v219 = vadd.f32 %v210, %v215
        %v220 = vadd.f32 %v211, %v216
        %v221 = vadd.f32 %v212, %v217
        %222 = vst [vmem:[#allocation2] sm:$0xff] %v218
        %223 = vst [vmem:[#allocation2 + $0x8] sm:$0xff] %v219
        %224 = vst [vmem:[#allocation2 + $0x10] sm:$0xff] %v220
        %225 = vst [vmem:[#allocation2 + $0x18] sm:$0xff] %v221
        %v226 = vld [vmem:[#allocation2] sm:$0xff]
        %v227 = vld [vmem:[#allocation2 + $0x8] sm:$0xff]
        %v228 = vld [vmem:[#allocation2 + $0x10] sm:$0xff]
        %v229 = vld [vmem:[#allocation2 + $0x18] sm:$0xff]
        %s230 = scalar_lea.vmem %s132, 32 [#allocation3]
        %v231 = vld [vmem:[%s230] sm:$0xff]
        %v232 = vld [vmem:[%s230 + $0x100] sm:$0xff]
        %v233 = vld [vmem:[%s230 + $0x200] sm:$0xff]
        %v234 = vld [vmem:[%s230 + $0x300] sm:$0xff]
        %v235 = vadd.f32 %v226, %v231
        %v236 = vadd.f32 %v227, %v232
        %v237 = vadd.f32 %v228, %v233
        %v238 = vadd.f32 %v229, %v234
        %239 = vst [vmem:[#allocation2] sm:$0xff] %v235
        %240 = vst [vmem:[#allocation2 + $0x8] sm:$0xff] %v236
        %241 = vst [vmem:[#allocation2 + $0x10] sm:$0xff] %v237
        %242 = vst [vmem:[#allocation2 + $0x18] sm:$0xff] %v238
        %v243 = vld [vmem:[#allocation2] sm:$0xff]
        %v244 = vld [vmem:[#allocation2 + $0x8] sm:$0xff]
        %v245 = vld [vmem:[#allocation2 + $0x10] sm:$0xff]
        %v246 = vld [vmem:[#allocation2 + $0x18] sm:$0xff]
        %s247 = scalar_lea.vmem %s132, 40 [#allocation3]
        %v248 = vld [vmem:[%s247] sm:$0xff]
        %v249 = vld [vmem:[%s247 + $0x100] sm:$0xff]
        %v250 = vld [vmem:[%s247 + $0x200] sm:$0xff]
        %v251 = vld [vmem:[%s247 + $0x300] sm:$0xff]
        %v252 = vadd.f32 %v243, %v248
        %v253 = vadd.f32 %v244, %v249
        %v254 = vadd.f32 %v245, %v250
        %v255 = vadd.f32 %v246, %v251
        %256 = vst [vmem:[#allocation2] sm:$0xff] %v252
        %257 = vst [vmem:[#allocation2 + $0x8] sm:$0xff] %v253
        %258 = vst [vmem:[#allocation2 + $0x10] sm:$0xff] %v254
        %259 = vst [vmem:[#allocation2 + $0x18] sm:$0xff] %v255
        %v260 = vld [vmem:[#allocation2] sm:$0xff]
        %v261 = vld [vmem:[#allocation2 + $0x8] sm:$0xff]
        %v262 = vld [vmem:[#allocation2 + $0x10] sm:$0xff]
        %v263 = vld [vmem:[#allocation2 + $0x18] sm:$0xff]
        %s264 = scalar_lea.vmem %s132, 48 [#allocation3]
        %v265 = vld [vmem:[%s264] sm:$0xff]
        %v266 = vld [vmem:[%s264 + $0x100] sm:$0xff]
        %v267 = vld [vmem:[%s264 + $0x200] sm:$0xff]
        %v268 = vld [vmem:[%s264 + $0x300] sm:$0xff]
        %v269 = vadd.f32 %v260, %v265
        %v270 = vadd.f32 %v261, %v266
        %v271 = vadd.f32 %v262, %v267
        %v272 = vadd.f32 %v263, %v268
        %273 = vst [vmem:[#allocation2] sm:$0xff] %v269
        %274 = vst [vmem:[#allocation2 + $0x8] sm:$0xff] %v270
        %275 = vst [vmem:[#allocation2 + $0x10] sm:$0xff] %v271
        %276 = vst [vmem:[#allocation2 + $0x18] sm:$0xff] %v272
        %v277 = vld [vmem:[#allocation2] sm:$0xff]
        %v278 = vld [vmem:[#allocation2 + $0x8] sm:$0xff]
        %v279 = vld [vmem:[#allocation2 + $0x10] sm:$0xff]
        %v280 = vld [vmem:[#allocation2 + $0x18] sm:$0xff]
        %s281 = scalar_lea.vmem %s132, 56 [#allocation3]
        %v282 = vld [vmem:[%s281] sm:$0xff]
        %v283 = vld [vmem:[%s281 + $0x100] sm:$0xff]
        %v284 = vld [vmem:[%s281 + $0x200] sm:$0xff]
        %v285 = vld [vmem:[%s281 + $0x300] sm:$0xff]
        %v286 = vadd.f32 %v277, %v282
        %v287 = vadd.f32 %v278, %v283
        %v288 = vadd.f32 %v279, %v284
        %v289 = vadd.f32 %v280, %v285
        %290 = vst [vmem:[#allocation2] sm:$0xff] %v286
        %291 = vst [vmem:[#allocation2 + $0x8] sm:$0xff] %v287
        %292 = vst [vmem:[#allocation2 + $0x10] sm:$0xff] %v288
        %293 = vst [vmem:[#allocation2 + $0x18] sm:$0xff] %v289
        %v294 = vld [vmem:[#allocation2] sm:$0xff]
        %v295 = vld [vmem:[#allocation2 + $0x8] sm:$0xff]
        %v296 = vld [vmem:[#allocation2 + $0x10] sm:$0xff]
        %v297 = vld [vmem:[#allocation2 + $0x18] sm:$0xff]
        %s298 = scalar_lea.vmem %s132, 64 [#allocation3]
        %v299 = vld [vmem:[%s298] sm:$0xff]
        %v300 = vld [vmem:[%s298 + $0x100] sm:$0xff]
        %v301 = vld [vmem:[%s298 + $0x200] sm:$0xff]
        %v302 = vld [vmem:[%s298 + $0x300] sm:$0xff]
        %v303 = vadd.f32 %v294, %v299
        %v304 = vadd.f32 %v295, %v300
        %v305 = vadd.f32 %v296, %v301
        %v306 = vadd.f32 %v297, %v302
        %307 = vst [vmem:[#allocation2] sm:$0xff] %v303
        %308 = vst [vmem:[#allocation2 + $0x8] sm:$0xff] %v304
        %309 = vst [vmem:[#allocation2 + $0x10] sm:$0xff] %v305
        %310 = vst [vmem:[#allocation2 + $0x18] sm:$0xff] %v306
        %v311 = vld [vmem:[#allocation2] sm:$0xff]
        %v312 = vld [vmem:[#allocation2 + $0x8] sm:$0xff]
        %v313 = vld [vmem:[#allocation2 + $0x10] sm:$0xff]
        %v314 = vld [vmem:[#allocation2 + $0x18] sm:$0xff]
        %s315 = scalar_lea.vmem %s132, 72 [#allocation3]
        %v316 = vld [vmem:[%s315] sm:$0xff]
        %v317 = vld [vmem:[%s315 + $0x100] sm:$0xff]
        %v318 = vld [vmem:[%s315 + $0x200] sm:$0xff]
        %v319 = vld [vmem:[%s315 + $0x300] sm:$0xff]
        %v320 = vadd.f32 %v311, %v316
        %v321 = vadd.f32 %v312, %v317
        %v322 = vadd.f32 %v313, %v318
        %v323 = vadd.f32 %v314, %v319
        %324 = vst [vmem:[#allocation2] sm:$0xff] %v320
        %325 = vst [vmem:[#allocation2 + $0x8] sm:$0xff] %v321
        %326 = vst [vmem:[#allocation2 + $0x10] sm:$0xff] %v322
        %327 = vst [vmem:[#allocation2 + $0x18] sm:$0xff] %v323
        %v328 = vld [vmem:[#allocation2] sm:$0xff]
        %v329 = vld [vmem:[#allocation2 + $0x8] sm:$0xff]
        %v330 = vld [vmem:[#allocation2 + $0x10] sm:$0xff]
        %v331 = vld [vmem:[#allocation2 + $0x18] sm:$0xff]
        %s332 = scalar_lea.vmem %s132, 80 [#allocation3]
        %v333 = vld [vmem:[%s332] sm:$0xff]
        %v334 = vld [vmem:[%s332 + $0x100] sm:$0xff]
        %v335 = vld [vmem:[%s332 + $0x200] sm:$0xff]
        %v336 = vld [vmem:[%s332 + $0x300] sm:$0xff]
        %v337 = vadd.f32 %v328, %v333
        %v338 = vadd.f32 %v329, %v334
        %v339 = vadd.f32 %v330, %v335
        %v340 = vadd.f32 %v331, %v336
        %341 = vst [vmem:[#allocation2] sm:$0xff] %v337
        %342 = vst [vmem:[#allocation2 + $0x8] sm:$0xff] %v338
        %343 = vst [vmem:[#allocation2 + $0x10] sm:$0xff] %v339
        %344 = vst [vmem:[#allocation2 + $0x18] sm:$0xff] %v340
        %v345 = vld [vmem:[#allocation2] sm:$0xff]
        %v346 = vld [vmem:[#allocation2 + $0x8] sm:$0xff]
        %v347 = vld [vmem:[#allocation2 + $0x10] sm:$0xff]
        %v348 = vld [vmem:[#allocation2 + $0x18] sm:$0xff]
        %s349 = scalar_lea.vmem %s132, 88 [#allocation3]
        %v350 = vld [vmem:[%s349] sm:$0xff]
        %v351 = vld [vmem:[%s349 + $0x100] sm:$0xff]
        %v352 = vld [vmem:[%s349 + $0x200] sm:$0xff]
        %v353 = vld [vmem:[%s349 + $0x300] sm:$0xff]
        %v354 = vadd.f32 %v345, %v350
        %v355 = vadd.f32 %v346, %v351
        %v356 = vadd.f32 %v347, %v352
        %v357 = vadd.f32 %v348, %v353
        %358 = vst [vmem:[#allocation2] sm:$0xff] %v354
        %359 = vst [vmem:[#allocation2 + $0x8] sm:$0xff] %v355
        %360 = vst [vmem:[#allocation2 + $0x10] sm:$0xff] %v356
        %361 = vst [vmem:[#allocation2 + $0x18] sm:$0xff] %v357
        %v362 = vld [vmem:[#allocation2] sm:$0xff]
        %v363 = vld [vmem:[#allocation2 + $0x8] sm:$0xff]
        %v364 = vld [vmem:[#allocation2 + $0x10] sm:$0xff]
        %v365 = vld [vmem:[#allocation2 + $0x18] sm:$0xff]
        %s366 = scalar_lea.vmem %s132, 96 [#allocation3]
        %v367 = vld [vmem:[%s366] sm:$0xff]
        %v368 = vld [vmem:[%s366 + $0x100] sm:$0xff]
        %v369 = vld [vmem:[%s366 + $0x200] sm:$0xff]
        %v370 = vld [vmem:[%s366 + $0x300] sm:$0xff]
        %v371 = vadd.f32 %v362, %v367
        %v372 = vadd.f32 %v363, %v368
        %v373 = vadd.f32 %v364, %v369
        %v374 = vadd.f32 %v365, %v370
        %375 = vst [vmem:[#allocation2] sm:$0xff] %v371
        %376 = vst [vmem:[#allocation2 + $0x8] sm:$0xff] %v372
        %377 = vst [vmem:[#allocation2 + $0x10] sm:$0xff] %v373
        %378 = vst [vmem:[#allocation2 + $0x18] sm:$0xff] %v374
        %v379 = vld [vmem:[#allocation2] sm:$0xff]
        %v380 = vld [vmem:[#allocation2 + $0x8] sm:$0xff]
        %v381 = vld [vmem:[#allocation2 + $0x10] sm:$0xff]
        %v382 = vld [vmem:[#allocation2 + $0x18] sm:$0xff]
        %s383 = scalar_lea.vmem %s132, 104 [#allocation3]
        %v384 = vld [vmem:[%s383] sm:$0xff]
        %v385 = vld [vmem:[%s383 + $0x100] sm:$0xff]
        %v386 = vld [vmem:[%s383 + $0x200] sm:$0xff]
        %v387 = vld [vmem:[%s383 + $0x300] sm:$0xff]
        %v388 = vadd.f32 %v379, %v384
        %v389 = vadd.f32 %v380, %v385
        %v390 = vadd.f32 %v381, %v386
        %v391 = vadd.f32 %v382, %v387
        %392 = vst [vmem:[#allocation2] sm:$0xff] %v388
        %393 = vst [vmem:[#allocation2 + $0x8] sm:$0xff] %v389
        %394 = vst [vmem:[#allocation2 + $0x10] sm:$0xff] %v390
        %395 = vst [vmem:[#allocation2 + $0x18] sm:$0xff] %v391
        %v396 = vld [vmem:[#allocation2] sm:$0xff]
        %v397 = vld [vmem:[#allocation2 + $0x8] sm:$0xff]
        %v398 = vld [vmem:[#allocation2 + $0x10] sm:$0xff]
        %v399 = vld [vmem:[#allocation2 + $0x18] sm:$0xff]
        %s400 = scalar_lea.vmem %s132, 112 [#allocation3]
        %v401 = vld [vmem:[%s400] sm:$0xff]
        %v402 = vld [vmem:[%s400 + $0x100] sm:$0xff]
        %v403 = vld [vmem:[%s400 + $0x200] sm:$0xff]
        %v404 = vld [vmem:[%s400 + $0x300] sm:$0xff]
        %v405 = vadd.f32 %v396, %v401
        %v406 = vadd.f32 %v397, %v402
        %v407 = vadd.f32 %v398, %v403
        %v408 = vadd.f32 %v399, %v404
        %409 = vst [vmem:[#allocation2] sm:$0xff] %v405
        %410 = vst [vmem:[#allocation2 + $0x8] sm:$0xff] %v406
        %411 = vst [vmem:[#allocation2 + $0x10] sm:$0xff] %v407
        %412 = vst [vmem:[#allocation2 + $0x18] sm:$0xff] %v408
        %v413 = vld [vmem:[#allocation2] sm:$0xff]
        %v414 = vld [vmem:[#allocation2 + $0x8] sm:$0xff]
        %v415 = vld [vmem:[#allocation2 + $0x10] sm:$0xff]
        %v416 = vld [vmem:[#allocation2 + $0x18] sm:$0xff]
        %s417 = scalar_lea.vmem %s132, 120 [#allocation3]
        %v418 = vld [vmem:[%s417] sm:$0xff]
        %v419 = vld [vmem:[%s417 + $0x100] sm:$0xff]
        %v420 = vld [vmem:[%s417 + $0x200] sm:$0xff]
        %v421 = vld [vmem:[%s417 + $0x300] sm:$0xff]
        %v422 = vadd.f32 %v413, %v418
        %v423 = vadd.f32 %v414, %v419
        %v424 = vadd.f32 %v415, %v420
        %v425 = vadd.f32 %v416, %v421
        %426 = vst [vmem:[#allocation2] sm:$0xff] %v422
        %427 = vst [vmem:[#allocation2 + $0x8] sm:$0xff] %v423
        %428 = vst [vmem:[#allocation2 + $0x10] sm:$0xff] %v424
        %429 = vst [vmem:[#allocation2 + $0x18] sm:$0xff] %v425
        %v430 = vld [vmem:[#allocation2] sm:$0xff]
        %v431 = vld [vmem:[#allocation2 + $0x8] sm:$0xff]
        %v432 = vld [vmem:[#allocation2 + $0x10] sm:$0xff]
        %v433 = vld [vmem:[#allocation2 + $0x18] sm:$0xff]
        %s434 = scalar_lea.vmem %s132, 128 [#allocation3]
        %v435 = vld [vmem:[%s434] sm:$0xff]
        %v436 = vld [vmem:[%s434 + $0x100] sm:$0xff]
        %v437 = vld [vmem:[%s434 + $0x200] sm:$0xff]
        %v438 = vld [vmem:[%s434 + $0x300] sm:$0xff]
        %v439 = vadd.f32 %v430, %v435
        %v440 = vadd.f32 %v431, %v436
        %v441 = vadd.f32 %v432, %v437
        %v442 = vadd.f32 %v433, %v438
        %443 = vst [vmem:[#allocation2] sm:$0xff] %v439
        %444 = vst [vmem:[#allocation2 + $0x8] sm:$0xff] %v440
        %445 = vst [vmem:[#allocation2 + $0x10] sm:$0xff] %v441
        %446 = vst [vmem:[#allocation2 + $0x18] sm:$0xff] %v442
        %v447 = vld [vmem:[#allocation2] sm:$0xff]
        %v448 = vld [vmem:[#allocation2 + $0x8] sm:$0xff]
        %v449 = vld [vmem:[#allocation2 + $0x10] sm:$0xff]
        %v450 = vld [vmem:[#allocation2 + $0x18] sm:$0xff]
        %s451 = scalar_lea.vmem %s132, 136 [#allocation3]
        %v452 = vld [vmem:[%s451] sm:$0xff]
        %v453 = vld [vmem:[%s451 + $0x100] sm:$0xff]
        %v454 = vld [vmem:[%s451 + $0x200] sm:$0xff]
        %v455 = vld [vmem:[%s451 + $0x300] sm:$0xff]
        %v456 = vadd.f32 %v447, %v452
        %v457 = vadd.f32 %v448, %v453
        %v458 = vadd.f32 %v449, %v454
        %v459 = vadd.f32 %v450, %v455
        %460 = vst [vmem:[#allocation2] sm:$0xff] %v456
        %461 = vst [vmem:[#allocation2 + $0x8] sm:$0xff] %v457
        %462 = vst [vmem:[#allocation2 + $0x10] sm:$0xff] %v458
        %463 = vst [vmem:[#allocation2 + $0x18] sm:$0xff] %v459
        %v464 = vld [vmem:[#allocation2] sm:$0xff]
        %v465 = vld [vmem:[#allocation2 + $0x8] sm:$0xff]
        %v466 = vld [vmem:[#allocation2 + $0x10] sm:$0xff]
        %v467 = vld [vmem:[#allocation2 + $0x18] sm:$0xff]
        %s468 = scalar_lea.vmem %s132, 144 [#allocation3]
        %v469 = vld [vmem:[%s468] sm:$0xff]
        %v470 = vld [vmem:[%s468 + $0x100] sm:$0xff]
        %v471 = vld [vmem:[%s468 + $0x200] sm:$0xff]
        %v472 = vld [vmem:[%s468 + $0x300] sm:$0xff]
        %v473 = vadd.f32 %v464, %v469
        %v474 = vadd.f32 %v465, %v470
        %v475 = vadd.f32 %v466, %v471
        %v476 = vadd.f32 %v467, %v472
        %477 = vst [vmem:[#allocation2] sm:$0xff] %v473
        %478 = vst [vmem:[#allocation2 + $0x8] sm:$0xff] %v474
        %479 = vst [vmem:[#allocation2 + $0x10] sm:$0xff] %v475
        %480 = vst [vmem:[#allocation2 + $0x18] sm:$0xff] %v476
        %v481 = vld [vmem:[#allocation2] sm:$0xff]
        %v482 = vld [vmem:[#allocation2 + $0x8] sm:$0xff]
        %v483 = vld [vmem:[#allocation2 + $0x10] sm:$0xff]
        %v484 = vld [vmem:[#allocation2 + $0x18] sm:$0xff]
        %s485 = scalar_lea.vmem %s132, 152 [#allocation3]
        %v486 = vld [vmem:[%s485] sm:$0xff]
        %v487 = vld [vmem:[%s485 + $0x100] sm:$0xff]
        %v488 = vld [vmem:[%s485 + $0x200] sm:$0xff]
        %v489 = vld [vmem:[%s485 + $0x300] sm:$0xff]
        %v490 = vadd.f32 %v481, %v486
        %v491 = vadd.f32 %v482, %v487
        %v492 = vadd.f32 %v483, %v488
        %v493 = vadd.f32 %v484, %v489
        %494 = vst [vmem:[#allocation2] sm:$0xff] %v490
        %495 = vst [vmem:[#allocation2 + $0x8] sm:$0xff] %v491
        %496 = vst [vmem:[#allocation2 + $0x10] sm:$0xff] %v492
        %497 = vst [vmem:[#allocation2 + $0x18] sm:$0xff] %v493
        %v498 = vld [vmem:[#allocation2] sm:$0xff]
        %v499 = vld [vmem:[#allocation2 + $0x8] sm:$0xff]
        %v500 = vld [vmem:[#allocation2 + $0x10] sm:$0xff]
        %v501 = vld [vmem:[#allocation2 + $0x18] sm:$0xff]
        %s502 = scalar_lea.vmem %s132, 160 [#allocation3]
        %v503 = vld [vmem:[%s502] sm:$0xff]
        %v504 = vld [vmem:[%s502 + $0x100] sm:$0xff]
        %v505 = vld [vmem:[%s502 + $0x200] sm:$0xff]
        %v506 = vld [vmem:[%s502 + $0x300] sm:$0xff]
        %v507 = vadd.f32 %v498, %v503
        %v508 = vadd.f32 %v499, %v504
        %v509 = vadd.f32 %v500, %v505
        %v510 = vadd.f32 %v501, %v506
        %511 = vst [vmem:[#allocation2] sm:$0xff] %v507
        %512 = vst [vmem:[#allocation2 + $0x8] sm:$0xff] %v508
        %513 = vst [vmem:[#allocation2 + $0x10] sm:$0xff] %v509
        %514 = vst [vmem:[#allocation2 + $0x18] sm:$0xff] %v510
        %v515 = vld [vmem:[#allocation2] sm:$0xff]
        %v516 = vld [vmem:[#allocation2 + $0x8] sm:$0xff]
        %v517 = vld [vmem:[#allocation2 + $0x10] sm:$0xff]
        %v518 = vld [vmem:[#allocation2 + $0x18] sm:$0xff]
        %s519 = scalar_lea.vmem %s132, 168 [#allocation3]
        %v520 = vld [vmem:[%s519] sm:$0xff]
        %v521 = vld [vmem:[%s519 + $0x100] sm:$0xff]
        %v522 = vld [vmem:[%s519 + $0x200] sm:$0xff]
        %v523 = vld [vmem:[%s519 + $0x300] sm:$0xff]
        %v524 = vadd.f32 %v515, %v520
        %v525 = vadd.f32 %v516, %v521
        %v526 = vadd.f32 %v517, %v522
        %v527 = vadd.f32 %v518, %v523
        %528 = vst [vmem:[#allocation2] sm:$0xff] %v524
        %529 = vst [vmem:[#allocation2 + $0x8] sm:$0xff] %v525
        %530 = vst [vmem:[#allocation2 + $0x10] sm:$0xff] %v526
        %531 = vst [vmem:[#allocation2 + $0x18] sm:$0xff] %v527
        %v532 = vld [vmem:[#allocation2] sm:$0xff]
        %v533 = vld [vmem:[#allocation2 + $0x8] sm:$0xff]
        %v534 = vld [vmem:[#allocation2 + $0x10] sm:$0xff]
        %v535 = vld [vmem:[#allocation2 + $0x18] sm:$0xff]
        %s536 = scalar_lea.vmem %s132, 176 [#allocation3]
        %v537 = vld [vmem:[%s536] sm:$0xff]
        %v538 = vld [vmem:[%s536 + $0x100] sm:$0xff]
        %v539 = vld [vmem:[%s536 + $0x200] sm:$0xff]
        %v540 = vld [vmem:[%s536 + $0x300] sm:$0xff]
        %v541 = vadd.f32 %v532, %v537
        %v542 = vadd.f32 %v533, %v538
        %v543 = vadd.f32 %v534, %v539
        %v544 = vadd.f32 %v535, %v540
        %545 = vst [vmem:[#allocation2] sm:$0xff] %v541
        %546 = vst [vmem:[#allocation2 + $0x8] sm:$0xff] %v542
        %547 = vst [vmem:[#allocation2 + $0x10] sm:$0xff] %v543
        %548 = vst [vmem:[#allocation2 + $0x18] sm:$0xff] %v544
        %v549 = vld [vmem:[#allocation2] sm:$0xff]
        %v550 = vld [vmem:[#allocation2 + $0x8] sm:$0xff]
        %v551 = vld [vmem:[#allocation2 + $0x10] sm:$0xff]
        %v552 = vld [vmem:[#allocation2 + $0x18] sm:$0xff]
        %s553 = scalar_lea.vmem %s132, 184 [#allocation3]
        %v554 = vld [vmem:[%s553] sm:$0xff]
        %v555 = vld [vmem:[%s553 + $0x100] sm:$0xff]
        %v556 = vld [vmem:[%s553 + $0x200] sm:$0xff]
        %v557 = vld [vmem:[%s553 + $0x300] sm:$0xff]
        %v558 = vadd.f32 %v549, %v554
        %v559 = vadd.f32 %v550, %v555
        %v560 = vadd.f32 %v551, %v556
        %v561 = vadd.f32 %v552, %v557
        %562 = vst [vmem:[#allocation2] sm:$0xff] %v558
        %563 = vst [vmem:[#allocation2 + $0x8] sm:$0xff] %v559
        %564 = vst [vmem:[#allocation2 + $0x10] sm:$0xff] %v560
        %565 = vst [vmem:[#allocation2 + $0x18] sm:$0xff] %v561
        %v566 = vld [vmem:[#allocation2] sm:$0xff]
        %v567 = vld [vmem:[#allocation2 + $0x8] sm:$0xff]
        %v568 = vld [vmem:[#allocation2 + $0x10] sm:$0xff]
        %v569 = vld [vmem:[#allocation2 + $0x18] sm:$0xff]
        %s570 = scalar_lea.vmem %s132, 192 [#allocation3]
        %v571 = vld [vmem:[%s570] sm:$0xff]
        %v572 = vld [vmem:[%s570 + $0x100] sm:$0xff]
        %v573 = vld [vmem:[%s570 + $0x200] sm:$0xff]
        %v574 = vld [vmem:[%s570 + $0x300] sm:$0xff]
        %v575 = vadd.f32 %v566, %v571
        %v576 = vadd.f32 %v567, %v572
        %v577 = vadd.f32 %v568, %v573
        %v578 = vadd.f32 %v569, %v574
        %579 = vst [vmem:[#allocation2] sm:$0xff] %v575
        %580 = vst [vmem:[#allocation2 + $0x8] sm:$0xff] %v576
        %581 = vst [vmem:[#allocation2 + $0x10] sm:$0xff] %v577
        %582 = vst [vmem:[#allocation2 + $0x18] sm:$0xff] %v578
        %v583 = vld [vmem:[#allocation2] sm:$0xff]
        %v584 = vld [vmem:[#allocation2 + $0x8] sm:$0xff]
        %v585 = vld [vmem:[#allocation2 + $0x10] sm:$0xff]
        %v586 = vld [vmem:[#allocation2 + $0x18] sm:$0xff]
        %s587 = scalar_lea.vmem %s132, 200 [#allocation3]
        %v588 = vld [vmem:[%s587] sm:$0xff]
        %v589 = vld [vmem:[%s587 + $0x100] sm:$0xff]
        %v590 = vld [vmem:[%s587 + $0x200] sm:$0xff]
        %v591 = vld [vmem:[%s587 + $0x300] sm:$0xff]
        %v592 = vadd.f32 %v583, %v588
        %v593 = vadd.f32 %v584, %v589
        %v594 = vadd.f32 %v585, %v590
        %v595 = vadd.f32 %v586, %v591
        %596 = vst [vmem:[#allocation2] sm:$0xff] %v592
        %597 = vst [vmem:[#allocation2 + $0x8] sm:$0xff] %v593
        %598 = vst [vmem:[#allocation2 + $0x10] sm:$0xff] %v594
        %599 = vst [vmem:[#allocation2 + $0x18] sm:$0xff] %v595
        %v600 = vld [vmem:[#allocation2] sm:$0xff]
        %v601 = vld [vmem:[#allocation2 + $0x8] sm:$0xff]
        %v602 = vld [vmem:[#allocation2 + $0x10] sm:$0xff]
        %v603 = vld [vmem:[#allocation2 + $0x18] sm:$0xff]
        %s604 = scalar_lea.vmem %s132, 208 [#allocation3]
        %v605 = vld [vmem:[%s604] sm:$0xff]
        %v606 = vld [vmem:[%s604 + $0x100] sm:$0xff]
        %v607 = vld [vmem:[%s604 + $0x200] sm:$0xff]
        %v608 = vld [vmem:[%s604 + $0x300] sm:$0xff]
        %v609 = vadd.f32 %v600, %v605
        %v610 = vadd.f32 %v601, %v606
        %v611 = vadd.f32 %v602, %v607
        %v612 = vadd.f32 %v603, %v608
        %613 = vst [vmem:[#allocation2] sm:$0xff] %v609
        %614 = vst [vmem:[#allocation2 + $0x8] sm:$0xff] %v610
        %615 = vst [vmem:[#allocation2 + $0x10] sm:$0xff] %v611
        %616 = vst [vmem:[#allocation2 + $0x18] sm:$0xff] %v612
        %v617 = vld [vmem:[#allocation2] sm:$0xff]
        %v618 = vld [vmem:[#allocation2 + $0x8] sm:$0xff]
        %v619 = vld [vmem:[#allocation2 + $0x10] sm:$0xff]
        %v620 = vld [vmem:[#allocation2 + $0x18] sm:$0xff]
        %s621 = scalar_lea.vmem %s132, 216 [#allocation3]
        %v622 = vld [vmem:[%s621] sm:$0xff]
        %v623 = vld [vmem:[%s621 + $0x100] sm:$0xff]
        %v624 = vld [vmem:[%s621 + $0x200] sm:$0xff]
        %v625 = vld [vmem:[%s621 + $0x300] sm:$0xff]
        %v626 = vadd.f32 %v617, %v622
        %v627 = vadd.f32 %v618, %v623
        %v628 = vadd.f32 %v619, %v624
        %v629 = vadd.f32 %v620, %v625
        %630 = vst [vmem:[#allocation2] sm:$0xff] %v626
        %631 = vst [vmem:[#allocation2 + $0x8] sm:$0xff] %v627
        %632 = vst [vmem:[#allocation2 + $0x10] sm:$0xff] %v628
        %633 = vst [vmem:[#allocation2 + $0x18] sm:$0xff] %v629
        %v634 = vld [vmem:[#allocation2] sm:$0xff]
        %v635 = vld [vmem:[#allocation2 + $0x8] sm:$0xff]
        %v636 = vld [vmem:[#allocation2 + $0x10] sm:$0xff]
        %v637 = vld [vmem:[#allocation2 + $0x18] sm:$0xff]
        %s638 = scalar_lea.vmem %s132, 224 [#allocation3]
        %v639 = vld [vmem:[%s638] sm:$0xff]
        %v640 = vld [vmem:[%s638 + $0x100] sm:$0xff]
        %v641 = vld [vmem:[%s638 + $0x200] sm:$0xff]
        %v642 = vld [vmem:[%s638 + $0x300] sm:$0xff]
        %v643 = vadd.f32 %v634, %v639
        %v644 = vadd.f32 %v635, %v640
        %v645 = vadd.f32 %v636, %v641
        %v646 = vadd.f32 %v637, %v642
        %647 = vst [vmem:[#allocation2] sm:$0xff] %v643
        %648 = vst [vmem:[#allocation2 + $0x8] sm:$0xff] %v644
        %649 = vst [vmem:[#allocation2 + $0x10] sm:$0xff] %v645
        %650 = vst [vmem:[#allocation2 + $0x18] sm:$0xff] %v646
        %v651 = vld [vmem:[#allocation2] sm:$0xff]
        %v652 = vld [vmem:[#allocation2 + $0x8] sm:$0xff]
        %v653 = vld [vmem:[#allocation2 + $0x10] sm:$0xff]
        %v654 = vld [vmem:[#allocation2 + $0x18] sm:$0xff]
        %s655 = scalar_lea.vmem %s132, 232 [#allocation3]
        %v656 = vld [vmem:[%s655] sm:$0xff]
        %v657 = vld [vmem:[%s655 + $0x100] sm:$0xff]
        %v658 = vld [vmem:[%s655 + $0x200] sm:$0xff]
        %v659 = vld [vmem:[%s655 + $0x300] sm:$0xff]
        %v660 = vadd.f32 %v651, %v656
        %v661 = vadd.f32 %v652, %v657
        %v662 = vadd.f32 %v653, %v658
        %v663 = vadd.f32 %v654, %v659
        %664 = vst [vmem:[#allocation2] sm:$0xff] %v660
        %665 = vst [vmem:[#allocation2 + $0x8] sm:$0xff] %v661
        %666 = vst [vmem:[#allocation2 + $0x10] sm:$0xff] %v662
        %667 = vst [vmem:[#allocation2 + $0x18] sm:$0xff] %v663
        %v668 = vld [vmem:[#allocation2] sm:$0xff]
        %v669 = vld [vmem:[#allocation2 + $0x8] sm:$0xff]
        %v670 = vld [vmem:[#allocation2 + $0x10] sm:$0xff]
        %v671 = vld [vmem:[#allocation2 + $0x18] sm:$0xff]
        %s672 = scalar_lea.vmem %s132, 240 [#allocation3]
        %v673 = vld [vmem:[%s672] sm:$0xff]
        %v674 = vld [vmem:[%s672 + $0x100] sm:$0xff]
        %v675 = vld [vmem:[%s672 + $0x200] sm:$0xff]
        %v676 = vld [vmem:[%s672 + $0x300] sm:$0xff]
        %v677 = vadd.f32 %v668, %v673
        %v678 = vadd.f32 %v669, %v674
        %v679 = vadd.f32 %v670, %v675
        %v680 = vadd.f32 %v671, %v676
        %681 = vst [vmem:[#allocation2] sm:$0xff] %v677
        %682 = vst [vmem:[#allocation2 + $0x8] sm:$0xff] %v678
        %683 = vst [vmem:[#allocation2 + $0x10] sm:$0xff] %v679
        %684 = vst [vmem:[#allocation2 + $0x18] sm:$0xff] %v680
        %v685 = vld [vmem:[#allocation2] sm:$0xff]
        %v686 = vld [vmem:[#allocation2 + $0x8] sm:$0xff]
        %v687 = vld [vmem:[#allocation2 + $0x10] sm:$0xff]
        %v688 = vld [vmem:[#allocation2 + $0x18] sm:$0xff]
        %s689 = scalar_lea.vmem %s132, 248 [#allocation3]
        %v690 = vld [vmem:[%s689] sm:$0xff]
        %v691 = vld [vmem:[%s689 + $0x100] sm:$0xff]
        %v692 = vld [vmem:[%s689 + $0x200] sm:$0xff]
        %v693 = vld [vmem:[%s689 + $0x300] sm:$0xff]
        %v694 = vadd.f32 %v685, %v690
        %v695 = vadd.f32 %v686, %v691
        %v696 = vadd.f32 %v687, %v692
        %v697 = vadd.f32 %v688, %v693
        %698 = vst [vmem:[#allocation2] sm:$0xff] %v694
        %699 = vst [vmem:[#allocation2 + $0x8] sm:$0xff] %v695
        %700 = vst [vmem:[#allocation2 + $0x10] sm:$0xff] %v696
        %701 = vst [vmem:[#allocation2 + $0x18] sm:$0xff] %v697
        %p702 = scmp.eq.s32.totalorder %s23, 3
        // Predicated region
        $region33: #{tpu_custom_call.1} parent=23 // pred_check
          %p703 = pneg %p702
        $region34: #{tpu_custom_call.1} parent=23 // pred_check_branch
          %705 = sbr.rel (%p703) target = $region36
        $region35: #{tpu_custom_call.1} parent=23 // pred_region
          %v706 = vld [vmem:[#allocation2] sm:$0xff]
          %v707 = vld [vmem:[#allocation2 + $0x8] sm:$0xff]
          %v708 = vld [vmem:[#allocation2 + $0x10] sm:$0xff]
          %v709 = vld [vmem:[#allocation2 + $0x18] sm:$0xff]
          %710 = vadd.xlane.f32.xlu0 %v706
          %v711 = vpop.xlane.xlu0 %710
          %712 = vadd.xlane.f32.xlu0 %v707
          %v713 = vpop.xlane.xlu0 %712
          %714 = vadd.xlane.f32.xlu0 %v708
          %v715 = vpop.xlane.xlu0 %714
          %716 = vadd.xlane.f32.xlu0 %v709
          %v717 = vpop.xlane.xlu0 %716
          %v718 = vmul.f32 %v711, 6.1035156e-05
          %v719 = vmul.f32 %v713, 6.1035156e-05
          %v720 = vmul.f32 %v715, 6.1035156e-05
          %v721 = vmul.f32 %v717, 6.1035156e-05
          %v726 = vlaneseq
          %v727 = vand.u32 %v726, 127
          %v728 = vlaneseq
          %v729 = vshrl.u32 %v728, 7
          %v730 = vsub.s32 %v727, %v729
          %v731 = vrot.slane %v718, %v730
          %v732 = vadd.s32 %v727, 4294967288
          %v733 = vlaneseq
          %v734 = vshrl.u32 %v733, 7
          %v735 = vsub.s32 %v732, %v734
          %v736 = vrot.slane %v719, %v735
          %vm737 = vcmask 130112
          %v738 = vsel %vm737, %v736, %v731
          %v739 = vadd.s32 %v727, 4294967280
          %v740 = vlaneseq
          %v741 = vshrl.u32 %v740, 7
          %v742 = vsub.s32 %v739, %v741
          %v743 = vrot.slane %v720, %v742
          %vm744 = vcmask 195712
          %v745 = vsel %vm744, %v743, %v738
          %v746 = vadd.s32 %v727, 4294967272
          %v747 = vlaneseq
          %v748 = vshrl.u32 %v747, 7
          %v749 = vsub.s32 %v746, %v748
          %v750 = vrot.slane %v721, %v749
          %vm751 = vcmask 261312
          %v752 = vsel %vm751, %v750, %v745
          %vm754 = vcmask 253952
          %755 = vst.msk [vmem:[%s149] sm:$0x1] %vm754, %v752
        $region36: #{tpu_custom_call.1} parent=23 // pred_fallthru
          _
        %s756 = sand.u32 %s66, 1
        %s757 = scalar_lea.sflag [#allocation5], %s756
        %s758 = sand.u32 %s66, 1
        %s759 = scalar_lea.vmem [#allocation6], %s758
        // Predicated region
        $region37: #{tpu_custom_call.1} parent=23 // pred_check
          %p760 = pneg %p76
        $region38: #{tpu_custom_call.1} parent=23 // pred_check_branch
          %762 = sbr.rel (%p760) target = $region40
        $region39: #{tpu_custom_call.1} parent=23 // pred_region
          %s764 = ssub.s32 16, 16
          %765 = vsyncadd %s757, %s764
          %s766 = smul.addr %s22, 16
          %s767 = scalar_lea.hbm %s1, %s766
          %s769 = sshll.u32 %s759, 4
          %s770 = int_to_ptr.vmem [resolvable:$true] %s769
          %772 = dma.vmem_to_hbm [thread:$0]  %s770, 16, %s767, %s757
        $region40: #{tpu_custom_call.1} parent=23 // pred_fallthru
          _
      $region24: #{tpu_custom_call.1} parent=5 // pred_fallthru
        _
      %p773 = scmp.le.s32.totalorder 2, %s13
      // Predicated region
      $region41: #{tpu_custom_call.1} parent=5 // pred_check
        %p774 = pneg %p773
      $region42: #{tpu_custom_call.1} parent=5 // pred_check_branch
        %776 = sbr.rel (%p774) target = $region44
      $region43: #{tpu_custom_call.1} parent=5 // pred_region
        %s777 = ssub.s32 %s13, 2
        // Predicated region
        $region45: #{tpu_custom_call.1} parent=43 // pred_check
          %p778 = pneg %p82
        $region46: #{tpu_custom_call.1} parent=43 // pred_check_branch
          %780 = sbr.rel (%p778) target = $region48
        $region47: #{tpu_custom_call.1} parent=43 // pred_region
          %s781 = sand.u32 %s67, 1
          %s782 = scalar_lea.sflag [#allocation5], %s781
          %s783 = sand.u32 %s67, 1
          %s784 = scalar_lea.vmem [#allocation6], %s783
          %785 = dma.done %s782, 16
        $region48: #{tpu_custom_call.1} parent=43 // pred_fallthru
          _
      $region44: #{tpu_custom_call.1} parent=5 // pred_fallthru
        _
    $region6: #{tpu_custom_call.1} parent=1 // loop_footer
      %s17 = sadd.s32 1, %s13
    $region7: #{tpu_custom_call.1} parent=1 // loop_footer_branch
      %12 = sbr.rel target = $region3
    $region8: #{tpu_custom_call.1} parent=1 // loop_exit
      _
    %786 = vsyncpa [#allocation4], 1
    %s787 = scalar_lea.sflag [#allocation4], 1
    %788 = vsyncpa %s787, 1
    %789 = vsyncpa [#allocation5], 1
    %s790 = scalar_lea.sflag [#allocation5], 1
    %791 = vsyncpa %s790, 1

</llo_original>
